<compile_context>
chip_gen: v5e
topology: v5e:2x2
jax: 0.10.0
libtpu: 0.0.40
codegen_flags: <defaults>
</compile_context>

<pallas_src>
import jax
import jax.numpy as jnp
from jax.experimental import pallas as pl
from jax.experimental.pallas import tpu as pltpu


def _round_up(x: int, m: int) -> int:
    return (x + m - 1) // m * m


# Per-generation tile caps, single-shot VMEM working-set budget, vmem limit.
_GEN_CFG = {
    "v5e":   dict(tm_cap=256, tn_cap=256, tk_cap=512, budget=12 << 20, vmem_limit=None),
    "v6e":   dict(tm_cap=512, tn_cap=512, tk_cap=512, budget=96 << 20, vmem_limit=100 << 20),
    "v7x":   dict(tm_cap=256, tn_cap=256, tk_cap=512, budget=24 << 20, vmem_limit=None),
    "other": dict(tm_cap=256, tn_cap=256, tk_cap=512, budget=12 << 20, vmem_limit=None),
}


def _tpu_generation() -> str:
    try:
        kind = jax.devices()[0].device_kind.lower()
    except Exception:
        return "other"
    if "v5 lite" in kind or "v5e" in kind:
        return "v5e"
    if "v6" in kind:
        return "v6e"
    if "v7" in kind:
        return "v7x"
    return "other"


def _linear_single_kernel(x_ref, w_ref, b_ref, o_ref):
    # Whole reduction resident in VMEM: one MXU push per (i, j) tile, no
    # accumulator, no k-axis branching.  In-kernel bf16 cast of x is a VPU op
    # hidden under MXU slack (no-op if x already arrived as bf16).
    o_ref[...] = (jnp.dot(x_ref[...].astype(jnp.bfloat16), w_ref[...],
                          preferred_element_type=jnp.float32)
                  + b_ref[...])


def _linear_kgrid_kernel(x_ref, w_ref, b_ref, o_ref):
    # K-strip reduction: accumulate directly into the resident f32 output tile
    # (out BlockSpec ignores k) — no VMEM scratch, no final acc->o copy.
    k = pl.program_id(2)
    part = jnp.dot(x_ref[...].astype(jnp.bfloat16), w_ref[...],
                   preferred_element_type=jnp.float32)

    @pl.when(k == 0)
    def _init():
        o_ref[...] = part

    @pl.when(k > 0)
    def _acc():
        o_ref[...] += part

    @pl.when(k == pl.num_programs(2) - 1)
    def _finalize():
        o_ref[...] += b_ref[...]


def make_fake_batch_linear(w, b, seq_len, *, generation=None, tile_overrides=None):
    """Build FakeBatch(Linear(w, b)).forward for activations of shape (seq_len, H).

    Pads and bf16-casts the static weight/bias ONCE (hoisted out of the per-call
    path) and returns a jitted forward(x) closure implementing
    unsqueeze(0) -> Linear -> squeeze(0).
    """
    if generation is None:
        generation = _tpu_generation()
    cfg = dict(_GEN_CFG.get(generation, _GEN_CFG["other"]))
    if tile_overrides:
        cfg.update(tile_overrides)

    H, O = w.shape
    S = int(seq_len)

    tm = min(cfg["tm_cap"], _round_up(S, 8))       # sublane-aligned row tile
    tn = min(cfg["tn_cap"], _round_up(O, 128))     # lane-dense output tile

    # v7x megacore: ensure the parallel (i, j) grid has >= 2 points so both
    # TensorCores get work (v5e/v6e have a single TC — unaffected).
    if generation == "v7x" and pl.cdiv(S, tm) * pl.cdiv(O, tn) < 2:
        if tm >= 16:
            tm = _round_up(max(8, tm // 2), 8)
        elif tn >= 256:
            tn //= 2

    S_pad = _round_up(S, tm)
    O_pad = _round_up(_round_up(O, 128), tn)
    grid_i, grid_j = S_pad // tm, O_pad // tn

    # Activation cast strategy: only pre-shrink x to bf16 in the wrapper when
    # its tiles are re-streamed for >= 3 output-column tiles; otherwise keep
    # f32 and cast inside the kernel (saves a full HBM pass over x per call).
    x_dtype = jnp.bfloat16 if grid_j >= 3 else jnp.float32
    x_bytes = 2 if x_dtype == jnp.bfloat16 else 4

    # Collapse the reduction axis when the full-H working set (double-buffered
    # x/w/out tiles + bias) fits the per-generation VMEM budget.
    H_full = _round_up(H, 128)
    single_bytes = (2 * tm * H_full * x_bytes      # x tile, double buffered
                    + 2 * H_full * tn * 2          # bf16 w tile, double buffered
                    + 2 * tm * tn * 4              # f32 output tile, double buffered
                    + 8 * tn * 4)                  # bias (sublane-padded)
    single_shot = single_bytes <= cfg["budget"]

    if single_shot:
        tk = H_pad = H_full
        grid = (grid_i, grid_j)
        in_specs = [
            pl.BlockSpec((tm, tk), lambda i, j: (i, 0)),   # x strip
            pl.BlockSpec((tk, tn), lambda i, j: (0, j)),   # w strip
            pl.BlockSpec((1, tn), lambda i, j: (0, j)),    # bias
        ]
        out_specs = pl.BlockSpec((tm, tn), lambda i, j: (i, j))
        kernel = _linear_single_kernel
        semantics = ("parallel", "parallel")
    else:
        tk = min(cfg["tk_cap"], H_full)
        H_pad = _round_up(H, tk)
        grid = (grid_i, grid_j, H_pad // tk)
        in_specs = [
            pl.BlockSpec((tm, tk), lambda i, j, k: (i, k)),
            pl.BlockSpec((tk, tn), lambda i, j, k: (k, j)),
            # bias block index ignores k -> only (re)fetched when j changes
            pl.BlockSpec((1, tn), lambda i, j, k: (0, j)),
        ]
        out_specs = pl.BlockSpec((tm, tn), lambda i, j, k: (i, j))
        kernel = _linear_kgrid_kernel
        semantics = ("parallel", "parallel", "arbitrary")

    # --- hoisted, one-time weight/bias preparation (no per-call pad/cast) ---
    w_p = jnp.pad(w.astype(jnp.float32),
                  ((0, H_pad - H), (0, O_pad - O))).astype(jnp.bfloat16)
    b_p = jnp.pad(b.astype(jnp.float32), (0, O_pad - O)).reshape(1, O_pad)

    call = pl.pallas_call(
        kernel,
        out_shape=jax.ShapeDtypeStruct((S_pad, O_pad), jnp.float32),
        grid_spec=pltpu.PrefetchScalarGridSpec(
            num_scalar_prefetch=0,
            grid=grid,
            in_specs=in_specs,
            out_specs=out_specs,
        ),
        compiler_params=pltpu.CompilerParams(
            dimension_semantics=semantics,
            vmem_limit_bytes=cfg["vmem_limit"]),
    )

    @jax.jit
    def forward(x):
        # --- FakeBatch: add fake leading batch dim (metadata only) ---
        x_b = x[None, ...]                               # (1, S, H)
        x2d = x_b.reshape(S, H)
        if S_pad != S or H_pad != H:
            x2d = jnp.pad(x2d, ((0, S_pad - S), (0, H_pad - H)))
        if x_dtype != jnp.float32:
            x2d = x2d.astype(x_dtype)
        y2d = call(x2d, w_p, b_p)[:S, :O]                # (S, O) f32
        # --- FakeBatch: strip fake batch dim ---
        return y2d.reshape(1, S, O)[0]

    return forward


if __name__ == "__main__":
    # Small shapes that exercise S/H/O padding, a multi-tile output axis and
    # the padded-column slice-back.
    S, H, O = 192, 500, 384

    key = jax.random.PRNGKey(0)
    kx, kw, kb = jax.random.split(key, 3)
    x = jax.random.normal(kx, (S, H), dtype=jnp.float32)
    w = jax.random.normal(kw, (H, O), dtype=jnp.float32) * 0.05
    b = jax.random.normal(kb, (O,), dtype=jnp.float32) * 0.01

    # Weights padded / cast once at build time (hoisted out of the call path).
    forward = make_fake_batch_linear(w, b, seq_len=S)
    y = forward(x)
    jax.block_until_ready(y)

    # Reference with the same unsqueeze/squeeze semantics and the same bf16
    # operand rounding (f32 accumulation), so only summation order differs.
    x_r = x.astype(jnp.bfloat16).astype(jnp.float32)
    w_r = w.astype(jnp.bfloat16).astype(jnp.float32)
    y_ref = (x_r[None, ...] @ w_r + b)[0]

    assert y.shape == (S, O)
    assert y.dtype == jnp.float32
    assert jnp.allclose(y, y_ref, atol=2e-3, rtol=2e-3)

    # Also exercise the multi-step reduction path (output-resident accumulation,
    # no scratch) by forcing the K grid axis with a tiny budget and tk=256.
    forward_kgrid = make_fake_batch_linear(
        w, b, seq_len=S, tile_overrides=dict(budget=0, tk_cap=256))
    y2 = forward_kgrid(x)
    jax.block_until_ready(y2)
    assert y2.shape == (S, O)
    assert jnp.allclose(y2, y_ref, atol=2e-3, rtol=2e-3)

    print("KERNEL_OK")
</pallas_src>

<mosaic_0001>
module attributes {stable_mosaic.version = 11 : i64} {
  func.func @_linear_single_kernel(%arg0: i32, %arg1: i32, %arg2: memref<192x512xf32, #tpu.memory_space<vmem>>, %arg3: memref<512x256xbf16, #tpu.memory_space<vmem>>, %arg4: memref<1x256xf32, #tpu.memory_space<vmem>>, %arg5: memref<192x256xf32, #tpu.memory_space<vmem>>) attributes {dimension_semantics = [#tpu.dimension_semantics<parallel>, #tpu.dimension_semantics<parallel>], iteration_bounds = array<i64: 1, 2>, scalar_prefetch = 0 : i64, scratch_operands = 0 : i64, tpu.core_type = #tpu.core_type<tc>, window_params = [{transform_indices = @transform_0, window_bounds = array<i64: 192, 512>}, {transform_indices = @transform_1, window_bounds = array<i64: 512, 256>}, {transform_indices = @transform_2, window_bounds = array<i64: 1, 256>}, {transform_indices = @transform_3, window_bounds = array<i64: 192, 256>}]} {
    %c0 = arith.constant 0 : index
    %c0_0 = arith.constant 0 : index
    %0 = vector.load %arg2[%c0, %c0_0] : memref<192x512xf32, #tpu.memory_space<vmem>>, vector<192x512xf32>
    %1 = arith.truncf %0 : vector<192x512xf32> to vector<192x512xbf16>
    %c0_1 = arith.constant 0 : index
    %c0_2 = arith.constant 0 : index
    %2 = vector.load %arg3[%c0_1, %c0_2] : memref<512x256xbf16, #tpu.memory_space<vmem>>, vector<512x256xbf16>
    %cst = arith.constant dense<0.000000e+00> : vector<192x256xf32>
    %3 = tpu.matmul %1, %2, %cst {dimension_numbers = #tpu.dot_dimension_numbers<[1], [0], [0], [1], [0, 0, 1, 1], [], []>} : vector<192x512xbf16>, vector<512x256xbf16>, vector<192x256xf32> -> vector<192x256xf32>
    %c0_3 = arith.constant 0 : index
    %c0_4 = arith.constant 0 : index
    %4 = vector.load %arg4[%c0_3, %c0_4] : memref<1x256xf32, #tpu.memory_space<vmem>>, vector<1x256xf32>
    %5 = vector.broadcast %4 : vector<1x256xf32> to vector<192x256xf32>
    %6 = arith.addf %3, %5 : vector<192x256xf32>
    %c0_5 = arith.constant 0 : index
    %c0_6 = arith.constant 0 : index
    %7 = vector.load %arg5[%c0_5, %c0_6] : memref<192x256xf32, #tpu.memory_space<vmem>>, vector<192x256xf32>
    tpu.vector_store %arg5[%c0_5, %c0_6], %6 {strides = array<i32>} : memref<192x256xf32, #tpu.memory_space<vmem>>, vector<192x256xf32>,
    return
  }
  func.func @transform_0(%arg0: i32, %arg1: i32) -> (i32, i32) {
    %c0_i32 = arith.constant 0 : i32
    %c0_i32_0 = arith.constant 0 : i32
    return %arg0, %c0_i32 : i32, i32
  }
  func.func @transform_1(%arg0: i32, %arg1: i32) -> (i32, i32) {
    %c0_i32 = arith.constant 0 : i32
    %c0_i32_0 = arith.constant 0 : i32
    return %c0_i32, %arg1 : i32, i32
  }
  func.func @transform_2(%arg0: i32, %arg1: i32) -> (i32, i32) {
    %c0_i32 = arith.constant 0 : i32
    %c0_i32_0 = arith.constant 0 : i32
    return %c0_i32, %arg1 : i32, i32
  }
  func.func @transform_3(%arg0: i32, %arg1: i32) -> (i32, i32) {
    %c0_i32 = arith.constant 0 : i32
    return %arg0, %arg1 : i32, i32
  }
}

</mosaic_0001>

<llo_original>
// kernel: forward.1
$region0: #{forward.1}
  #allocation0 [shape = 'u32[]', space=smem, size = 0x4, offset = 0x4, fixed_abs, tag = 'smem constant byte address 0x4 - core index']
  #allocation1 [shape = 'u32[72,128]{1,0:T(1,128)}', space=vmem, size = 0x9000, scoped, tag = 'internal scratch']
  %s0 = inlined_call_operand.vmem [shape: f32[192,512], index: 0, kind: input, shape index: {}]
  %s1 = inlined_call_operand.vmem [shape: bf16[512,512], index: 1, kind: input, shape index: {}]
  %s2 = inlined_call_operand.vmem [shape: f32[1,512], index: 2, kind: input, shape index: {}]
  %s3 = inlined_call_operand.vmem [shape: f32[192,512], index: 3, kind: output, shape index: {}]
  %s4 = sld [smem:[#allocation0]]
  $region102: #{forward.1} parent=0
    _
  %s6 = ssub.s32 1, %s4
  %s7 = scalar_select 0, %s6, %s4
  $region1: #{forward.1} parent=0
    #allocation2 [shape = 'u8[524288]{0}', space=vmem, size = 0x80000, scoped, tag = 'input window, operand 1']
    #allocation3 [shape = 'u8[393216]{0}', space=vmem, size = 0x60000, scoped, tag = 'output window, operand 0']
    loop: start=0, step=1, limit=4
    $region2: #{forward.1} parent=1 // loop_pre_header
      _
    $region3: #{forward.1} parent=1 // loop_header
      %s9 = sphi 0, %s13
      %p10 = scmp.ge.s32.totalorder %s9, 4
      %s16 = sphi 0, %s28
      %s17 = sphi 0, %s24
      %s18 = sphi 0, %s16
      %s19 = sphi 0, %s17
      %s20 = sphi 0, %s18
      %s21 = sphi 0, %s19
      %s31 = sphi 0, %s33
      %s34 = sphi 0, %s31
      %s35 = sphi 0, %s34
      %s51 = sphi 0, %s35
      %s57 = sphi 0, %s59
      %s60 = sphi 0, %s57
      %s61 = sphi 0, %s60
      %s77 = sphi 0, %s61
      %s83 = sphi 0, %s85
      %s86 = sphi 0, %s83
      %s87 = sphi 0, %s86
      %s103 = sphi 0, %s87
      %s111 = sphi 0, %s113
      %s114 = sphi 0, %s111
      %s115 = sphi 0, %s114
      %s131 = sphi 0, %s115
    $region4: #{forward.1} parent=1 // loop_header_branch
      %12 = sbr.rel (%p10) target = $region8
    $region5: #{forward.1} parent=1 // loop_body
      %s14 = ssub.s32 %s9, 1
      %s15 = ssub.s32 %s9, 2
      %s22 = sadd.s32 1, %s17
      %p23 = scmp.ge.s32.totalorder %s22, 2
      %s24 = scalar_select %p23, 0, %s22
      %s25 = sadd.s32 1, %s16
      %s26 = scalar_select %p23, %s25, %s16
      %p27 = scmp.ge.s32.totalorder %s26, 1
      %s28 = scalar_select %p27, 0, %s26
      %s29 = ssub.s32 %s16, %s28
      %p30 = scmp.eq.s32.totalorder %s29, 0
      %s32 = sadd.s32 %s31, 1
      %s33 = scalar_select %p30, %s31, %s32
      %p36 = pneg %p30
      %p37 = scmp.eq.s32.totalorder %s9, 1
      %p38 = por %p36, %p37
      %p39 = scmp.ne.s32.totalorder %s31, %s34
      %p40 = scmp.eq.s32.totalorder %s9, 0
      %p41 = por %p39, %p40
      %p42 = scmp.ne.s32.totalorder %s31, %s34
      %p43 = scmp.eq.s32.totalorder %s14, 1
      %p44 = por %p42, %p43
      %p45 = scmp.ne.s32.totalorder %s34, %s35
      %p46 = scmp.eq.s32.totalorder %s14, 0
      %p47 = por %p45, %p46
      %p48 = scmp.ne.s32.totalorder %s34, %s35
      %p49 = scmp.eq.s32.totalorder %s15, 1
      %p50 = por %p48, %p49
      %p52 = scmp.ne.s32.totalorder %s35, %s51
      %p53 = scmp.eq.s32.totalorder %s15, 0
      %p54 = por %p52, %p53
      %s55 = ssub.s32 %s17, %s24
      %p56 = scmp.eq.s32.totalorder %s55, 0
      %s58 = sadd.s32 %s57, 1
      %s59 = scalar_select %p56, %s57, %s58
      %p62 = pneg %p56
      %p63 = scmp.eq.s32.totalorder %s9, 1
      %p64 = por %p62, %p63
      %p65 = scmp.ne.s32.totalorder %s57, %s60
      %p66 = scmp.eq.s32.totalorder %s9, 0
      %p67 = por %p65, %p66
      %p68 = scmp.ne.s32.totalorder %s57, %s60
      %p69 = scmp.eq.s32.totalorder %s14, 1
      %p70 = por %p68, %p69
      %p71 = scmp.ne.s32.totalorder %s60, %s61
      %p72 = scmp.eq.s32.totalorder %s14, 0
      %p73 = por %p71, %p72
      %p74 = scmp.ne.s32.totalorder %s60, %s61
      %p75 = scmp.eq.s32.totalorder %s15, 1
      %p76 = por %p74, %p75
      %p78 = scmp.ne.s32.totalorder %s61, %s77
      %p79 = scmp.eq.s32.totalorder %s15, 0
      %p80 = por %p78, %p79
      %s81 = ssub.s32 %s17, %s24
      %p82 = scmp.eq.s32.totalorder %s81, 0
      %s84 = sadd.s32 %s83, 1
      %s85 = scalar_select %p82, %s83, %s84
      %p88 = pneg %p82
      %p89 = scmp.eq.s32.totalorder %s9, 1
      %p90 = por %p88, %p89
      %p91 = scmp.ne.s32.totalorder %s83, %s86
      %p92 = scmp.eq.s32.totalorder %s9, 0
      %p93 = por %p91, %p92
      %p94 = scmp.ne.s32.totalorder %s83, %s86
      %p95 = scmp.eq.s32.totalorder %s14, 1
      %p96 = por %p94, %p95
      %p97 = scmp.ne.s32.totalorder %s86, %s87
      %p98 = scmp.eq.s32.totalorder %s14, 0
      %p99 = por %p97, %p98
      %p100 = scmp.ne.s32.totalorder %s86, %s87
      %p101 = scmp.eq.s32.totalorder %s15, 1
      %p102 = por %p100, %p101
      %p104 = scmp.ne.s32.totalorder %s87, %s103
      %p105 = scmp.eq.s32.totalorder %s15, 0
      %p106 = por %p104, %p105
      %s107 = ssub.s32 %s16, %s28
      %s108 = ssub.s32 %s17, %s24
      %s109 = sor.u32 %s107, %s108
      %p110 = scmp.eq.s32.totalorder %s109, 0
      %s112 = sadd.s32 %s111, 1
      %s113 = scalar_select %p110, %s111, %s112
      %p116 = pneg %p110
      %p117 = scmp.eq.s32.totalorder %s9, 1
      %p118 = por %p116, %p117
      %p119 = scmp.ne.s32.totalorder %s111, %s114
      %p120 = scmp.eq.s32.totalorder %s9, 0
      %p121 = por %p119, %p120
      %p122 = scmp.ne.s32.totalorder %s111, %s114
      %p123 = scmp.eq.s32.totalorder %s14, 1
      %p124 = por %p122, %p123
      %p125 = scmp.ne.s32.totalorder %s114, %s115
      %p126 = scmp.eq.s32.totalorder %s14, 0
      %p127 = por %p125, %p126
      %p128 = scmp.ne.s32.totalorder %s114, %s115
      %p129 = scmp.eq.s32.totalorder %s15, 1
      %p130 = por %p128, %p129
      %p132 = scmp.ne.s32.totalorder %s115, %s131
      %p133 = scmp.eq.s32.totalorder %s15, 0
      %p134 = por %p132, %p133
      %p135 = scmp.le.s32.totalorder 1, %s9
      %p136 = scmp.lt.s32.totalorder %s9, 3
      %p137 = pnand %p135, %p136
      %p138 = pneg %p137
      // Predicated region
      $region9: #{forward.1} parent=5 // pred_check
        _
      $region10: #{forward.1} parent=5 // pred_check_branch
        %140 = sbr.rel (%p137) target = $region12
      $region11: #{forward.1} parent=5 // pred_region
        %s141 = ssub.s32 %s9, 1
        // Predicated region
        $region13: #{forward.1} parent=11 // pred_check
          %p142 = pneg %p47
        $region14: #{forward.1} parent=11 // pred_check_branch
          %144 = sbr.rel (%p142) target = $region16
        $region15: #{forward.1} parent=11 // pred_region
          %s145 = smul.u32 24, %s18
          %p146 = scmp.lt.s32.totalorder %s145, 23
          %s147 = scalar_select %p146, %s145, 23
          %s148 = smul.addr %s147, 4
          %s149 = smul.addr %s148, 8
          %s150 = scalar_lea.vmem %s0, %s149
          %s151 = smul.u32 24, %s18
        $region16: #{forward.1} parent=11 // pred_fallthru
          _
      $region12: #{forward.1} parent=5 // pred_fallthru
        _
      %p152 = scmp.lt.s32.totalorder %s9, 2
      // Predicated region
      $region17: #{forward.1} parent=5 // pred_check
        %p153 = pneg %p152
      $region18: #{forward.1} parent=5 // pred_check_branch
        %155 = sbr.rel (%p153) target = $region20
      $region19: #{forward.1} parent=5 // pred_region
        // Predicated region
        $region21: #{forward.1} parent=19 // pred_check
          %p156 = pneg %p67
        $region22: #{forward.1} parent=19 // pred_check_branch
          %158 = sbr.rel (%p156) target = $region24
        $region23: #{forward.1} parent=19 // pred_region
          %s159 = sand.u32 %s57, 1
          %s160 = sand.u32 %s57, 1
          %s161 = smul.addr %s160, 512
          %s162 = scalar_lea.vmem [#allocation2], %s161
          %s163 = smul.u32 2, %s17
          %s164 = smul.addr %s163, 4
          %s165 = scalar_lea.vmem %s1, %s164
          // Predicated region
          $region25: #{forward.1} parent=23 // pred_check
            _
          $region26: #{forward.1} parent=23 // pred_check_branch
            %167 = sbr.rel (0) target = $region28
          $region27: #{forward.1} parent=23 // pred_region
            // Predicated region
            $region29: #{forward.1} parent=27 // pred_check
              _
            $region30: #{forward.1} parent=27 // pred_check_branch
              %169 = sbr.rel (0) target = $region32
            $region31: #{forward.1} parent=27 // pred_region
              // Predicated region
              $region44: #{forward.1} parent=31 // pred_check
                _
              $region45: #{forward.1} parent=31 // pred_check_branch
                %311 = sbr.rel (0) target = $region47
              $region46: #{forward.1} parent=31 // pred_region
                loop: start=0, step=1, limit=1
                $region48: #{forward.1} parent=46 // loop_pre_header
                  _
                $region49: #{forward.1} parent=46 // loop_header
                  %s313 = sphi 0, %s317
                  %p314 = scmp.ge.s32.totalorder %s313, 1
                  %s318 = sphi %s165, %s165
                  %s319 = sphi %s162, %s162
                $region50: #{forward.1} parent=46 // loop_header_branch
                  %316 = sbr.rel (%p314) target = $region54
                $region51: #{forward.1} parent=46 // loop_body
                  %v320 = vld [vmem:[%s318] sm:$0xff]
                  %321 = vst [vmem:[%s319] sm:$0xff] %v320
                  %v322 = vld [vmem:[%s318 + $0x10] sm:$0xff]
                  %323 = vst [vmem:[%s319 + $0x8] sm:$0xff] %v322
                  %v324 = vld [vmem:[%s318 + $0x20] sm:$0xff]
                  %325 = vst [vmem:[%s319 + $0x10] sm:$0xff] %v324
                  %v326 = vld [vmem:[%s318 + $0x30] sm:$0xff]
                  %327 = vst [vmem:[%s319 + $0x18] sm:$0xff] %v326
                  %v328 = vld [vmem:[%s318 + $0x40] sm:$0xff]
                  %329 = vst [vmem:[%s319 + $0x20] sm:$0xff] %v328
                  %v330 = vld [vmem:[%s318 + $0x50] sm:$0xff]
                  %331 = vst [vmem:[%s319 + $0x28] sm:$0xff] %v330
                  %v332 = vld [vmem:[%s318 + $0x60] sm:$0xff]
                  %333 = vst [vmem:[%s319 + $0x30] sm:$0xff] %v332
                  %v334 = vld [vmem:[%s318 + $0x70] sm:$0xff]
                  %335 = vst [vmem:[%s319 + $0x38] sm:$0xff] %v334
                  %v336 = vld [vmem:[%s318 + $0x80] sm:$0xff]
                  %337 = vst [vmem:[%s319 + $0x40] sm:$0xff] %v336
                  %v338 = vld [vmem:[%s318 + $0x90] sm:$0xff]
                  %339 = vst [vmem:[%s319 + $0x48] sm:$0xff] %v338
                  %v340 = vld [vmem:[%s318 + $0xa0] sm:$0xff]
                  %341 = vst [vmem:[%s319 + $0x50] sm:$0xff] %v340
                  %v342 = vld [vmem:[%s318 + $0xb0] sm:$0xff]
                  %343 = vst [vmem:[%s319 + $0x58] sm:$0xff] %v342
                  %v344 = vld [vmem:[%s318 + $0xc0] sm:$0xff]
                  %345 = vst [vmem:[%s319 + $0x60] sm:$0xff] %v344
                  %v346 = vld [vmem:[%s318 + $0xd0] sm:$0xff]
                  %347 = vst [vmem:[%s319 + $0x68] sm:$0xff] %v346
                  %v348 = vld [vmem:[%s318 + $0xe0] sm:$0xff]
                  %349 = vst [vmem:[%s319 + $0x70] sm:$0xff] %v348
                  %v350 = vld [vmem:[%s318 + $0xf0] sm:$0xff]
                  %351 = vst [vmem:[%s319 + $0x78] sm:$0xff] %v350
                  %v352 = vld [vmem:[%s318 + $0x100] sm:$0xff]
                  %353 = vst [vmem:[%s319 + $0x80] sm:$0xff] %v352
                  %v354 = vld [vmem:[%s318 + $0x110] sm:$0xff]
                  %355 = vst [vmem:[%s319 + $0x88] sm:$0xff] %v354
                  %v356 = vld [vmem:[%s318 + $0x120] sm:$0xff]
                  %357 = vst [vmem:[%s319 + $0x90] sm:$0xff] %v356
                  %v358 = vld [vmem:[%s318 + $0x130] sm:$0xff]
                  %359 = vst [vmem:[%s319 + $0x98] sm:$0xff] %v358
                  %v360 = vld [vmem:[%s318 + $0x140] sm:$0xff]
                  %361 = vst [vmem:[%s319 + $0xa0] sm:$0xff] %v360
                  %v362 = vld [vmem:[%s318 + $0x150] sm:$0xff]
                  %363 = vst [vmem:[%s319 + $0xa8] sm:$0xff] %v362
                  %v364 = vld [vmem:[%s318 + $0x160] sm:$0xff]
                  %365 = vst [vmem:[%s319 + $0xb0] sm:$0xff] %v364
                  %v366 = vld [vmem:[%s318 + $0x170] sm:$0xff]
                  %367 = vst [vmem:[%s319 + $0xb8] sm:$0xff] %v366
                  %v368 = vld [vmem:[%s318 + $0x180] sm:$0xff]
                  %369 = vst [vmem:[%s319 + $0xc0] sm:$0xff] %v368
                  %v370 = vld [vmem:[%s318 + $0x190] sm:$0xff]
                  %371 = vst [vmem:[%s319 + $0xc8] sm:$0xff] %v370
                  %v372 = vld [vmem:[%s318 + $0x1a0] sm:$0xff]
                  %373 = vst [vmem:[%s319 + $0xd0] sm:$0xff] %v372
                  %v374 = vld [vmem:[%s318 + $0x1b0] sm:$0xff]
                  %375 = vst [vmem:[%s319 + $0xd8] sm:$0xff] %v374
                  %v376 = vld [vmem:[%s318 + $0x1c0] sm:$0xff]
                  %377 = vst [vmem:[%s319 + $0xe0] sm:$0xff] %v376
                  %v378 = vld [vmem:[%s318 + $0x1d0] sm:$0xff]
                  %379 = vst [vmem:[%s319 + $0xe8] sm:$0xff] %v378
                  %v380 = vld [vmem:[%s318 + $0x1e0] sm:$0xff]
                  %381 = vst [vmem:[%s319 + $0xf0] sm:$0xff] %v380
                  %v382 = vld [vmem:[%s318 + $0x1f0] sm:$0xff]
                  %383 = vst [vmem:[%s319 + $0xf8] sm:$0xff] %v382
                  %v384 = vld [vmem:[%s318 + $0x200] sm:$0xff]
                  %385 = vst [vmem:[%s319 + $0x100] sm:$0xff] %v384
                  %v386 = vld [vmem:[%s318 + $0x210] sm:$0xff]
                  %387 = vst [vmem:[%s319 + $0x108] sm:$0xff] %v386
                  %v388 = vld [vmem:[%s318 + $0x220] sm:$0xff]
                  %389 = vst [vmem:[%s319 + $0x110] sm:$0xff] %v388
                  %v390 = vld [vmem:[%s318 + $0x230] sm:$0xff]
                  %391 = vst [vmem:[%s319 + $0x118] sm:$0xff] %v390
                  %v392 = vld [vmem:[%s318 + $0x240] sm:$0xff]
                  %393 = vst [vmem:[%s319 + $0x120] sm:$0xff] %v392
                  %v394 = vld [vmem:[%s318 + $0x250] sm:$0xff]
                  %395 = vst [vmem:[%s319 + $0x128] sm:$0xff] %v394
                  %v396 = vld [vmem:[%s318 + $0x260] sm:$0xff]
                  %397 = vst [vmem:[%s319 + $0x130] sm:$0xff] %v396
                  %v398 = vld [vmem:[%s318 + $0x270] sm:$0xff]
                  %399 = vst [vmem:[%s319 + $0x138] sm:$0xff] %v398
                  %v400 = vld [vmem:[%s318 + $0x280] sm:$0xff]
                  %401 = vst [vmem:[%s319 + $0x140] sm:$0xff] %v400
                  %v402 = vld [vmem:[%s318 + $0x290] sm:$0xff]
                  %403 = vst [vmem:[%s319 + $0x148] sm:$0xff] %v402
                  %v404 = vld [vmem:[%s318 + $0x2a0] sm:$0xff]
                  %405 = vst [vmem:[%s319 + $0x150] sm:$0xff] %v404
                  %v406 = vld [vmem:[%s318 + $0x2b0] sm:$0xff]
                  %407 = vst [vmem:[%s319 + $0x158] sm:$0xff] %v406
                  %v408 = vld [vmem:[%s318 + $0x2c0] sm:$0xff]
                  %409 = vst [vmem:[%s319 + $0x160] sm:$0xff] %v408
                  %v410 = vld [vmem:[%s318 + $0x2d0] sm:$0xff]
                  %411 = vst [vmem:[%s319 + $0x168] sm:$0xff] %v410
                  %v412 = vld [vmem:[%s318 + $0x2e0] sm:$0xff]
                  %413 = vst [vmem:[%s319 + $0x170] sm:$0xff] %v412
                  %v414 = vld [vmem:[%s318 + $0x2f0] sm:$0xff]
                  %415 = vst [vmem:[%s319 + $0x178] sm:$0xff] %v414
                  %v416 = vld [vmem:[%s318 + $0x300] sm:$0xff]
                  %417 = vst [vmem:[%s319 + $0x180] sm:$0xff] %v416
                  %v418 = vld [vmem:[%s318 + $0x310] sm:$0xff]
                  %419 = vst [vmem:[%s319 + $0x188] sm:$0xff] %v418
                  %v420 = vld [vmem:[%s318 + $0x320] sm:$0xff]
                  %421 = vst [vmem:[%s319 + $0x190] sm:$0xff] %v420
                  %v422 = vld [vmem:[%s318 + $0x330] sm:$0xff]
                  %423 = vst [vmem:[%s319 + $0x198] sm:$0xff] %v422
                  %v424 = vld [vmem:[%s318 + $0x340] sm:$0xff]
                  %425 = vst [vmem:[%s319 + $0x1a0] sm:$0xff] %v424
                  %v426 = vld [vmem:[%s318 + $0x350] sm:$0xff]
                  %427 = vst [vmem:[%s319 + $0x1a8] sm:$0xff] %v426
                  %v428 = vld [vmem:[%s318 + $0x360] sm:$0xff]
                  %429 = vst [vmem:[%s319 + $0x1b0] sm:$0xff] %v428
                  %v430 = vld [vmem:[%s318 + $0x370] sm:$0xff]
                  %431 = vst [vmem:[%s319 + $0x1b8] sm:$0xff] %v430
                  %v432 = vld [vmem:[%s318 + $0x380] sm:$0xff]
                  %433 = vst [vmem:[%s319 + $0x1c0] sm:$0xff] %v432
                  %v434 = vld [vmem:[%s318 + $0x390] sm:$0xff]
                  %435 = vst [vmem:[%s319 + $0x1c8] sm:$0xff] %v434
                  %v436 = vld [vmem:[%s318 + $0x3a0] sm:$0xff]
                  %437 = vst [vmem:[%s319 + $0x1d0] sm:$0xff] %v436
                  %v438 = vld [vmem:[%s318 + $0x3b0] sm:$0xff]
                  %439 = vst [vmem:[%s319 + $0x1d8] sm:$0xff] %v438
                  %v440 = vld [vmem:[%s318 + $0x3c0] sm:$0xff]
                  %441 = vst [vmem:[%s319 + $0x1e0] sm:$0xff] %v440
                  %v442 = vld [vmem:[%s318 + $0x3d0] sm:$0xff]
                  %443 = vst [vmem:[%s319 + $0x1e8] sm:$0xff] %v442
                  %v444 = vld [vmem:[%s318 + $0x3e0] sm:$0xff]
                  %445 = vst [vmem:[%s319 + $0x1f0] sm:$0xff] %v444
                  %v446 = vld [vmem:[%s318 + $0x3f0] sm:$0xff]
                  %447 = vst [vmem:[%s319 + $0x1f8] sm:$0xff] %v446
                $region52: #{forward.1} parent=46 // loop_footer
                  %s317 = sadd.s32 1, %s313
                $region53: #{forward.1} parent=46 // loop_footer_branch
                  %312 = sbr.rel target = $region49
                $region54: #{forward.1} parent=46 // loop_exit
                  _
              $region47: #{forward.1} parent=31 // pred_fallthru
                _
              // Predicated region
              $region55: #{forward.1} parent=31 // pred_check
                _
              $region56: #{forward.1} parent=31 // pred_check_branch
                %449 = sbr.rel target = $region58
              $region57: #{forward.1} parent=31 // pred_region
                _
              $region58: #{forward.1} parent=31 // pred_fallthru
                _
            $region32: #{forward.1} parent=27 // pred_fallthru
              _
            // Predicated region
            $region33: #{forward.1} parent=27 // pred_check
              _
            $region34: #{forward.1} parent=27 // pred_check_branch
              %171 = sbr.rel target = $region36
            $region35: #{forward.1} parent=27 // pred_region
              %s173 = ssub.s32 256, 1
              loop: start=0, step=1, limit=1
              $region37: #{forward.1} parent=35 // loop_pre_header
                _
              $region38: #{forward.1} parent=35 // loop_header
                %s175 = sphi 0, %s179
                %p176 = scmp.ge.s32.totalorder %s175, 1
                %s180 = sphi %s165, %s165
                %s181 = sphi %s162, %s162
              $region39: #{forward.1} parent=35 // loop_header_branch
                %178 = sbr.rel (%p176) target = $region43
              $region40: #{forward.1} parent=35 // loop_body
                %v182 = vld [vmem:[%s180] sm:%s173]
                %183 = vst [vmem:[%s181] sm:%s173] %v182
                %v184 = vld [vmem:[%s180 + $0x10] sm:%s173]
                %185 = vst [vmem:[%s181 + $0x8] sm:%s173] %v184
                %v186 = vld [vmem:[%s180 + $0x20] sm:%s173]
                %187 = vst [vmem:[%s181 + $0x10] sm:%s173] %v186
                %v188 = vld [vmem:[%s180 + $0x30] sm:%s173]
                %189 = vst [vmem:[%s181 + $0x18] sm:%s173] %v188
                %v190 = vld [vmem:[%s180 + $0x40] sm:%s173]
                %191 = vst [vmem:[%s181 + $0x20] sm:%s173] %v190
                %v192 = vld [vmem:[%s180 + $0x50] sm:%s173]
                %193 = vst [vmem:[%s181 + $0x28] sm:%s173] %v192
                %v194 = vld [vmem:[%s180 + $0x60] sm:%s173]
                %195 = vst [vmem:[%s181 + $0x30] sm:%s173] %v194
                %v196 = vld [vmem:[%s180 + $0x70] sm:%s173]
                %197 = vst [vmem:[%s181 + $0x38] sm:%s173] %v196
                %v198 = vld [vmem:[%s180 + $0x80] sm:%s173]
                %199 = vst [vmem:[%s181 + $0x40] sm:%s173] %v198
                %v200 = vld [vmem:[%s180 + $0x90] sm:%s173]
                %201 = vst [vmem:[%s181 + $0x48] sm:%s173] %v200
                %v202 = vld [vmem:[%s180 + $0xa0] sm:%s173]
                %203 = vst [vmem:[%s181 + $0x50] sm:%s173] %v202
                %v204 = vld [vmem:[%s180 + $0xb0] sm:%s173]
                %205 = vst [vmem:[%s181 + $0x58] sm:%s173] %v204
                %v206 = vld [vmem:[%s180 + $0xc0] sm:%s173]
                %207 = vst [vmem:[%s181 + $0x60] sm:%s173] %v206
                %v208 = vld [vmem:[%s180 + $0xd0] sm:%s173]
                %209 = vst [vmem:[%s181 + $0x68] sm:%s173] %v208
                %v210 = vld [vmem:[%s180 + $0xe0] sm:%s173]
                %211 = vst [vmem:[%s181 + $0x70] sm:%s173] %v210
                %v212 = vld [vmem:[%s180 + $0xf0] sm:%s173]
                %213 = vst [vmem:[%s181 + $0x78] sm:%s173] %v212
                %v214 = vld [vmem:[%s180 + $0x100] sm:%s173]
                %215 = vst [vmem:[%s181 + $0x80] sm:%s173] %v214
                %v216 = vld [vmem:[%s180 + $0x110] sm:%s173]
                %217 = vst [vmem:[%s181 + $0x88] sm:%s173] %v216
                %v218 = vld [vmem:[%s180 + $0x120] sm:%s173]
                %219 = vst [vmem:[%s181 + $0x90] sm:%s173] %v218
                %v220 = vld [vmem:[%s180 + $0x130] sm:%s173]
                %221 = vst [vmem:[%s181 + $0x98] sm:%s173] %v220
                %v222 = vld [vmem:[%s180 + $0x140] sm:%s173]
                %223 = vst [vmem:[%s181 + $0xa0] sm:%s173] %v222
                %v224 = vld [vmem:[%s180 + $0x150] sm:%s173]
                %225 = vst [vmem:[%s181 + $0xa8] sm:%s173] %v224
                %v226 = vld [vmem:[%s180 + $0x160] sm:%s173]
                %227 = vst [vmem:[%s181 + $0xb0] sm:%s173] %v226
                %v228 = vld [vmem:[%s180 + $0x170] sm:%s173]
                %229 = vst [vmem:[%s181 + $0xb8] sm:%s173] %v228
                %v230 = vld [vmem:[%s180 + $0x180] sm:%s173]
                %231 = vst [vmem:[%s181 + $0xc0] sm:%s173] %v230
                %v232 = vld [vmem:[%s180 + $0x190] sm:%s173]
                %233 = vst [vmem:[%s181 + $0xc8] sm:%s173] %v232
                %v234 = vld [vmem:[%s180 + $0x1a0] sm:%s173]
                %235 = vst [vmem:[%s181 + $0xd0] sm:%s173] %v234
                %v236 = vld [vmem:[%s180 + $0x1b0] sm:%s173]
                %237 = vst [vmem:[%s181 + $0xd8] sm:%s173] %v236
                %v238 = vld [vmem:[%s180 + $0x1c0] sm:%s173]
                %239 = vst [vmem:[%s181 + $0xe0] sm:%s173] %v238
                %v240 = vld [vmem:[%s180 + $0x1d0] sm:%s173]
                %241 = vst [vmem:[%s181 + $0xe8] sm:%s173] %v240
                %v242 = vld [vmem:[%s180 + $0x1e0] sm:%s173]
                %243 = vst [vmem:[%s181 + $0xf0] sm:%s173] %v242
                %v244 = vld [vmem:[%s180 + $0x1f0] sm:%s173]
                %245 = vst [vmem:[%s181 + $0xf8] sm:%s173] %v244
                %v246 = vld [vmem:[%s180 + $0x200] sm:%s173]
                %247 = vst [vmem:[%s181 + $0x100] sm:%s173] %v246
                %v248 = vld [vmem:[%s180 + $0x210] sm:%s173]
                %249 = vst [vmem:[%s181 + $0x108] sm:%s173] %v248
                %v250 = vld [vmem:[%s180 + $0x220] sm:%s173]
                %251 = vst [vmem:[%s181 + $0x110] sm:%s173] %v250
                %v252 = vld [vmem:[%s180 + $0x230] sm:%s173]
                %253 = vst [vmem:[%s181 + $0x118] sm:%s173] %v252
                %v254 = vld [vmem:[%s180 + $0x240] sm:%s173]
                %255 = vst [vmem:[%s181 + $0x120] sm:%s173] %v254
                %v256 = vld [vmem:[%s180 + $0x250] sm:%s173]
                %257 = vst [vmem:[%s181 + $0x128] sm:%s173] %v256
                %v258 = vld [vmem:[%s180 + $0x260] sm:%s173]
                %259 = vst [vmem:[%s181 + $0x130] sm:%s173] %v258
                %v260 = vld [vmem:[%s180 + $0x270] sm:%s173]
                %261 = vst [vmem:[%s181 + $0x138] sm:%s173] %v260
                %v262 = vld [vmem:[%s180 + $0x280] sm:%s173]
                %263 = vst [vmem:[%s181 + $0x140] sm:%s173] %v262
                %v264 = vld [vmem:[%s180 + $0x290] sm:%s173]
                %265 = vst [vmem:[%s181 + $0x148] sm:%s173] %v264
                %v266 = vld [vmem:[%s180 + $0x2a0] sm:%s173]
                %267 = vst [vmem:[%s181 + $0x150] sm:%s173] %v266
                %v268 = vld [vmem:[%s180 + $0x2b0] sm:%s173]
                %269 = vst [vmem:[%s181 + $0x158] sm:%s173] %v268
                %v270 = vld [vmem:[%s180 + $0x2c0] sm:%s173]
                %271 = vst [vmem:[%s181 + $0x160] sm:%s173] %v270
                %v272 = vld [vmem:[%s180 + $0x2d0] sm:%s173]
                %273 = vst [vmem:[%s181 + $0x168] sm:%s173] %v272
                %v274 = vld [vmem:[%s180 + $0x2e0] sm:%s173]
                %275 = vst [vmem:[%s181 + $0x170] sm:%s173] %v274
                %v276 = vld [vmem:[%s180 + $0x2f0] sm:%s173]
                %277 = vst [vmem:[%s181 + $0x178] sm:%s173] %v276
                %v278 = vld [vmem:[%s180 + $0x300] sm:%s173]
                %279 = vst [vmem:[%s181 + $0x180] sm:%s173] %v278
                %v280 = vld [vmem:[%s180 + $0x310] sm:%s173]
                %281 = vst [vmem:[%s181 + $0x188] sm:%s173] %v280
                %v282 = vld [vmem:[%s180 + $0x320] sm:%s173]
                %283 = vst [vmem:[%s181 + $0x190] sm:%s173] %v282
                %v284 = vld [vmem:[%s180 + $0x330] sm:%s173]
                %285 = vst [vmem:[%s181 + $0x198] sm:%s173] %v284
                %v286 = vld [vmem:[%s180 + $0x340] sm:%s173]
                %287 = vst [vmem:[%s181 + $0x1a0] sm:%s173] %v286
                %v288 = vld [vmem:[%s180 + $0x350] sm:%s173]
                %289 = vst [vmem:[%s181 + $0x1a8] sm:%s173] %v288
                %v290 = vld [vmem:[%s180 + $0x360] sm:%s173]
                %291 = vst [vmem:[%s181 + $0x1b0] sm:%s173] %v290
                %v292 = vld [vmem:[%s180 + $0x370] sm:%s173]
                %293 = vst [vmem:[%s181 + $0x1b8] sm:%s173] %v292
                %v294 = vld [vmem:[%s180 + $0x380] sm:%s173]
                %295 = vst [vmem:[%s181 + $0x1c0] sm:%s173] %v294
                %v296 = vld [vmem:[%s180 + $0x390] sm:%s173]
                %297 = vst [vmem:[%s181 + $0x1c8] sm:%s173] %v296
                %v298 = vld [vmem:[%s180 + $0x3a0] sm:%s173]
                %299 = vst [vmem:[%s181 + $0x1d0] sm:%s173] %v298
                %v300 = vld [vmem:[%s180 + $0x3b0] sm:%s173]
                %301 = vst [vmem:[%s181 + $0x1d8] sm:%s173] %v300
                %v302 = vld [vmem:[%s180 + $0x3c0] sm:%s173]
                %303 = vst [vmem:[%s181 + $0x1e0] sm:%s173] %v302
                %v304 = vld [vmem:[%s180 + $0x3d0] sm:%s173]
                %305 = vst [vmem:[%s181 + $0x1e8] sm:%s173] %v304
                %v306 = vld [vmem:[%s180 + $0x3e0] sm:%s173]
                %307 = vst [vmem:[%s181 + $0x1f0] sm:%s173] %v306
                %v308 = vld [vmem:[%s180 + $0x3f0] sm:%s173]
                %309 = vst [vmem:[%s181 + $0x1f8] sm:%s173] %v308
              $region41: #{forward.1} parent=35 // loop_footer
                %s179 = sadd.s32 1, %s175
              $region42: #{forward.1} parent=35 // loop_footer_branch
                %174 = sbr.rel target = $region38
              $region43: #{forward.1} parent=35 // loop_exit
                _
            $region36: #{forward.1} parent=27 // pred_fallthru
              _
          $region28: #{forward.1} parent=23 // pred_fallthru
            _
          %450 = vnop
        $region24: #{forward.1} parent=19 // pred_fallthru
          _
        // Predicated region
        $region59: #{forward.1} parent=19 // pred_check
          %p451 = pneg %p93
        $region60: #{forward.1} parent=19 // pred_check_branch
          %453 = sbr.rel (%p451) target = $region62
        $region61: #{forward.1} parent=19 // pred_region
          %s454 = smul.u32 2, %s17
          %p455 = scmp.lt.s32.totalorder %s454, 3
          %s456 = scalar_select %p455, %s454, 3
          %s457 = scalar_lea.vmem %s2, %s456
          %s458 = smul.u32 2, %s17
        $region62: #{forward.1} parent=19 // pred_fallthru
          _
      $region20: #{forward.1} parent=5 // pred_fallthru
        _
      %p459 = scmp.le.s32.totalorder 1, %s9
      %p460 = scmp.lt.s32.totalorder %s9, 3
      %p461 = pnand %p459, %p460
      %p462 = pneg %p461
      // Predicated region
      $region63: #{forward.1} parent=5 // pred_check
        _
      $region64: #{forward.1} parent=5 // pred_check_branch
        %464 = sbr.rel (%p461) target = $region66
      $region65: #{forward.1} parent=5 // pred_region
        %s465 = ssub.s32 %s9, 1
        %s466 = sand.u32 %s60, 1
        %s467 = sand.u32 %s60, 1
        %s468 = smul.addr %s467, 512
        %s469 = scalar_lea.vmem [#allocation2], %s468
        // Predicated region
        $region67: #{forward.1} parent=65 // pred_check
          %p470 = pneg %p73
        $region68: #{forward.1} parent=65 // pred_check_branch
          %472 = sbr.rel (%p470) target = $region70
        $region69: #{forward.1} parent=65 // pred_region
          _
        $region70: #{forward.1} parent=65 // pred_fallthru
          _
        %s473 = smul.u32 24, %s18
        %p474 = scmp.lt.s32.totalorder %s473, 23
        %s475 = scalar_select %p474, %s473, 23
        %s476 = smul.addr %s475, 4
        %s477 = smul.addr %s476, 8
        %s478 = scalar_lea.vmem %s0, %s477
        %p479 = pneg %p47
        %p480 = pneg %p44
        %s481 = sand.u32 %s60, 1
        %s482 = sand.u32 %s60, 1
        %s483 = smul.addr %s482, 512
        %s484 = scalar_lea.vmem [#allocation2], %s483
        %p485 = pneg %p73
        %p486 = pneg %p70
        %s487 = smul.u32 2, %s19
        %p488 = scmp.lt.s32.totalorder %s487, 3
        %s489 = scalar_select %p488, %s487, 3
        %s490 = scalar_lea.vmem %s2, %s489
        %p491 = pneg %p99
        %p492 = pneg %p96
        %p493 = pneg %p127
        %p494 = pneg %p124
        %s495 = sand.u32 %s114, 1
        %s496 = sand.u32 %s114, 1
        %s497 = smul.addr %s496, 384
        %s498 = scalar_lea.vmem [#allocation3], %s497
        %s499 = smul.u32 24, %s18
        %p500 = scmp.lt.s32.totalorder %s499, 23
        %s501 = scalar_select %p500, %s499, 23
        %s502 = smul.addr %s501, 4
        %s503 = smul.addr %s502, 8
        %s504 = scalar_lea.vmem %s0, %s503
        %s505 = smul.u32 24, %s18
        %s506 = smul.u32 2, %s19
        %s507 = smul.u32 2, %s19
        %p508 = scmp.lt.s32.totalorder %s507, 3
        %s509 = scalar_select %p508, %s507, 3
        %s510 = scalar_lea.vmem %s2, %s509
        %s511 = smul.u32 2, %s19
        %s512 = smul.u32 24, %s18
        %s513 = smul.u32 2, %s19
        %v514 = vld [vmem:[%s504] sm:$0xff]
        %v515 = vld [vmem:[%s504 + $0x8] sm:$0xff]
        %v516 = vld [vmem:[%s504 + $0x10] sm:$0xff]
        %v517 = vld [vmem:[%s504 + $0x18] sm:$0xff]
        %v518 = vld [vmem:[%s504 + $0x20] sm:$0xff]
        %v519 = vld [vmem:[%s504 + $0x28] sm:$0xff]
        %v520 = vld [vmem:[%s504 + $0x30] sm:$0xff]
        %v521 = vld [vmem:[%s504 + $0x38] sm:$0xff]
        %v522 = vld [vmem:[%s504 + $0x40] sm:$0xff]
        %v523 = vld [vmem:[%s504 + $0x48] sm:$0xff]
        %v524 = vld [vmem:[%s504 + $0x50] sm:$0xff]
        %v525 = vld [vmem:[%s504 + $0x58] sm:$0xff]
        %v526 = vld [vmem:[%s504 + $0x60] sm:$0xff]
        %v527 = vld [vmem:[%s504 + $0x68] sm:$0xff]
        %v528 = vld [vmem:[%s504 + $0x70] sm:$0xff]
        %v529 = vld [vmem:[%s504 + $0x78] sm:$0xff]
        %v530 = vld [vmem:[%s504 + $0x80] sm:$0xff]
        %v531 = vld [vmem:[%s504 + $0x88] sm:$0xff]
        %v532 = vld [vmem:[%s504 + $0x90] sm:$0xff]
        %v533 = vld [vmem:[%s504 + $0x98] sm:$0xff]
        %v534 = vld [vmem:[%s504 + $0xa0] sm:$0xff]
        %v535 = vld [vmem:[%s504 + $0xa8] sm:$0xff]
        %v536 = vld [vmem:[%s504 + $0xb0] sm:$0xff]
        %v537 = vld [vmem:[%s504 + $0xb8] sm:$0xff]
        %v538 = vld [vmem:[%s504 + $0xc0] sm:$0xff]
        %v539 = vld [vmem:[%s504 + $0xc8] sm:$0xff]
        %v540 = vld [vmem:[%s504 + $0xd0] sm:$0xff]
        %v541 = vld [vmem:[%s504 + $0xd8] sm:$0xff]
        %v542 = vld [vmem:[%s504 + $0xe0] sm:$0xff]
        %v543 = vld [vmem:[%s504 + $0xe8] sm:$0xff]
        %v544 = vld [vmem:[%s504 + $0xf0] sm:$0xff]
        %v545 = vld [vmem:[%s504 + $0xf8] sm:$0xff]
        %v546 = vld [vmem:[%s504 + $0x100] sm:$0xff]
        %v547 = vld [vmem:[%s504 + $0x108] sm:$0xff]
        %v548 = vld [vmem:[%s504 + $0x110] sm:$0xff]
        %v549 = vld [vmem:[%s504 + $0x118] sm:$0xff]
        %v550 = vld [vmem:[%s504 + $0x120] sm:$0xff]
        %v551 = vld [vmem:[%s504 + $0x128] sm:$0xff]
        %v552 = vld [vmem:[%s504 + $0x130] sm:$0xff]
        %v553 = vld [vmem:[%s504 + $0x138] sm:$0xff]
        %v554 = vld [vmem:[%s504 + $0x140] sm:$0xff]
        %v555 = vld [vmem:[%s504 + $0x148] sm:$0xff]
        %v556 = vld [vmem:[%s504 + $0x150] sm:$0xff]
        %v557 = vld [vmem:[%s504 + $0x158] sm:$0xff]
        %v558 = vld [vmem:[%s504 + $0x160] sm:$0xff]
        %v559 = vld [vmem:[%s504 + $0x168] sm:$0xff]
        %v560 = vld [vmem:[%s504 + $0x170] sm:$0xff]
        %v561 = vld [vmem:[%s504 + $0x178] sm:$0xff]
        %v562 = vld [vmem:[%s504 + $0x180] sm:$0xff]
        %v563 = vld [vmem:[%s504 + $0x188] sm:$0xff]
        %v564 = vld [vmem:[%s504 + $0x190] sm:$0xff]
        %v565 = vld [vmem:[%s504 + $0x198] sm:$0xff]
        %v566 = vld [vmem:[%s504 + $0x1a0] sm:$0xff]
        %v567 = vld [vmem:[%s504 + $0x1a8] sm:$0xff]
        %v568 = vld [vmem:[%s504 + $0x1b0] sm:$0xff]
        %v569 = vld [vmem:[%s504 + $0x1b8] sm:$0xff]
        %v570 = vld [vmem:[%s504 + $0x1c0] sm:$0xff]
        %v571 = vld [vmem:[%s504 + $0x1c8] sm:$0xff]
        %v572 = vld [vmem:[%s504 + $0x1d0] sm:$0xff]
        %v573 = vld [vmem:[%s504 + $0x1d8] sm:$0xff]
        %v574 = vld [vmem:[%s504 + $0x1e0] sm:$0xff]
        %v575 = vld [vmem:[%s504 + $0x1e8] sm:$0xff]
        %v576 = vld [vmem:[%s504 + $0x1f0] sm:$0xff]
        %v577 = vld [vmem:[%s504 + $0x1f8] sm:$0xff]
        %v578 = vld [vmem:[%s504 + $0x200] sm:$0xff]
        %v579 = vld [vmem:[%s504 + $0x208] sm:$0xff]
        %v580 = vld [vmem:[%s504 + $0x210] sm:$0xff]
        %v581 = vld [vmem:[%s504 + $0x218] sm:$0xff]
        %v582 = vld [vmem:[%s504 + $0x220] sm:$0xff]
        %v583 = vld [vmem:[%s504 + $0x228] sm:$0xff]
        %v584 = vld [vmem:[%s504 + $0x230] sm:$0xff]
        %v585 = vld [vmem:[%s504 + $0x238] sm:$0xff]
        %v586 = vld [vmem:[%s504 + $0x240] sm:$0xff]
        %v587 = vld [vmem:[%s504 + $0x248] sm:$0xff]
        %v588 = vld [vmem:[%s504 + $0x250] sm:$0xff]
        %v589 = vld [vmem:[%s504 + $0x258] sm:$0xff]
        %v590 = vld [vmem:[%s504 + $0x260] sm:$0xff]
        %v591 = vld [vmem:[%s504 + $0x268] sm:$0xff]
        %v592 = vld [vmem:[%s504 + $0x270] sm:$0xff]
        %v593 = vld [vmem:[%s504 + $0x278] sm:$0xff]
        %v594 = vld [vmem:[%s504 + $0x280] sm:$0xff]
        %v595 = vld [vmem:[%s504 + $0x288] sm:$0xff]
        %v596 = vld [vmem:[%s504 + $0x290] sm:$0xff]
        %v597 = vld [vmem:[%s504 + $0x298] sm:$0xff]
        %v598 = vld [vmem:[%s504 + $0x2a0] sm:$0xff]
        %v599 = vld [vmem:[%s504 + $0x2a8] sm:$0xff]
        %v600 = vld [vmem:[%s504 + $0x2b0] sm:$0xff]
        %v601 = vld [vmem:[%s504 + $0x2b8] sm:$0xff]
        %v602 = vld [vmem:[%s504 + $0x2c0] sm:$0xff]
        %v603 = vld [vmem:[%s504 + $0x2c8] sm:$0xff]
        %v604 = vld [vmem:[%s504 + $0x2d0] sm:$0xff]
        %v605 = vld [vmem:[%s504 + $0x2d8] sm:$0xff]
        %v606 = vld [vmem:[%s504 + $0x2e0] sm:$0xff]
        %v607 = vld [vmem:[%s504 + $0x2e8] sm:$0xff]
        %v608 = vld [vmem:[%s504 + $0x2f0] sm:$0xff]
        %v609 = vld [vmem:[%s504 + $0x2f8] sm:$0xff]
        %v610 = vpack.c.bf16 %v518, %v514
        %v611 = vpack.c.bf16 %v519, %v515
        %v612 = vpack.c.bf16 %v520, %v516
        %v613 = vpack.c.bf16 %v521, %v517
        %v614 = vpack.c.bf16 %v526, %v522
        %v615 = vpack.c.bf16 %v527, %v523
        %v616 = vpack.c.bf16 %v528, %v524
        %v617 = vpack.c.bf16 %v529, %v525
        %v618 = vpack.c.bf16 %v534, %v530
        %v619 = vpack.c.bf16 %v535, %v531
        %v620 = vpack.c.bf16 %v536, %v532
        %v621 = vpack.c.bf16 %v537, %v533
        %v622 = vpack.c.bf16 %v542, %v538
        %v623 = vpack.c.bf16 %v543, %v539
        %v624 = vpack.c.bf16 %v544, %v540
        %v625 = vpack.c.bf16 %v545, %v541
        %v626 = vpack.c.bf16 %v550, %v546
        %v627 = vpack.c.bf16 %v551, %v547
        %v628 = vpack.c.bf16 %v552, %v548
        %v629 = vpack.c.bf16 %v553, %v549
        %v630 = vpack.c.bf16 %v558, %v554
        %v631 = vpack.c.bf16 %v559, %v555
        %v632 = vpack.c.bf16 %v560, %v556
        %v633 = vpack.c.bf16 %v561, %v557
        %v634 = vpack.c.bf16 %v566, %v562
        %v635 = vpack.c.bf16 %v567, %v563
        %v636 = vpack.c.bf16 %v568, %v564
        %v637 = vpack.c.bf16 %v569, %v565
        %v638 = vpack.c.bf16 %v574, %v570
        %v639 = vpack.c.bf16 %v575, %v571
        %v640 = vpack.c.bf16 %v576, %v572
        %v641 = vpack.c.bf16 %v577, %v573
        %v642 = vpack.c.bf16 %v582, %v578
        %v643 = vpack.c.bf16 %v583, %v579
        %v644 = vpack.c.bf16 %v584, %v580
        %v645 = vpack.c.bf16 %v585, %v581
        %v646 = vpack.c.bf16 %v590, %v586
        %v647 = vpack.c.bf16 %v591, %v587
        %v648 = vpack.c.bf16 %v592, %v588
        %v649 = vpack.c.bf16 %v593, %v589
        %v650 = vpack.c.bf16 %v598, %v594
        %v651 = vpack.c.bf16 %v599, %v595
        %v652 = vpack.c.bf16 %v600, %v596
        %v653 = vpack.c.bf16 %v601, %v597
        %v654 = vpack.c.bf16 %v606, %v602
        %v655 = vpack.c.bf16 %v607, %v603
        %v656 = vpack.c.bf16 %v608, %v604
        %v657 = vpack.c.bf16 %v609, %v605
        %v658 = vld [vmem:[%s469] sm:$0xff]
        %v659 = vld [vmem:[%s469 + $0x8] sm:$0xff]
        %v660 = vld [vmem:[%s469 + $0x10] sm:$0xff]
        %v661 = vld [vmem:[%s469 + $0x18] sm:$0xff]
        %v662 = vld [vmem:[%s469 + $0x20] sm:$0xff]
        %v663 = vld [vmem:[%s469 + $0x28] sm:$0xff]
        %v664 = vld [vmem:[%s469 + $0x30] sm:$0xff]
        %v665 = vld [vmem:[%s469 + $0x38] sm:$0xff]
        %v666 = vld [vmem:[%s469 + $0x40] sm:$0xff]
        %v667 = vld [vmem:[%s469 + $0x48] sm:$0xff]
        %v668 = vld [vmem:[%s469 + $0x50] sm:$0xff]
        %v669 = vld [vmem:[%s469 + $0x58] sm:$0xff]
        %v670 = vld [vmem:[%s469 + $0x60] sm:$0xff]
        %v671 = vld [vmem:[%s469 + $0x68] sm:$0xff]
        %v672 = vld [vmem:[%s469 + $0x70] sm:$0xff]
        %v673 = vld [vmem:[%s469 + $0x78] sm:$0xff]
        %v674 = vld [vmem:[%s469 + $0x80] sm:$0xff]
        %v675 = vld [vmem:[%s469 + $0x88] sm:$0xff]
        %v676 = vld [vmem:[%s469 + $0x90] sm:$0xff]
        %v677 = vld [vmem:[%s469 + $0x98] sm:$0xff]
        %v678 = vld [vmem:[%s469 + $0xa0] sm:$0xff]
        %v679 = vld [vmem:[%s469 + $0xa8] sm:$0xff]
        %v680 = vld [vmem:[%s469 + $0xb0] sm:$0xff]
        %v681 = vld [vmem:[%s469 + $0xb8] sm:$0xff]
        %v682 = vld [vmem:[%s469 + $0xc0] sm:$0xff]
        %v683 = vld [vmem:[%s469 + $0xc8] sm:$0xff]
        %v684 = vld [vmem:[%s469 + $0xd0] sm:$0xff]
        %v685 = vld [vmem:[%s469 + $0xd8] sm:$0xff]
        %v686 = vld [vmem:[%s469 + $0xe0] sm:$0xff]
        %v687 = vld [vmem:[%s469 + $0xe8] sm:$0xff]
        %v688 = vld [vmem:[%s469 + $0xf0] sm:$0xff]
        %v689 = vld [vmem:[%s469 + $0xf8] sm:$0xff]
        %v690 = vld [vmem:[%s469 + $0x100] sm:$0xff]
        %v691 = vld [vmem:[%s469 + $0x108] sm:$0xff]
        %v692 = vld [vmem:[%s469 + $0x110] sm:$0xff]
        %v693 = vld [vmem:[%s469 + $0x118] sm:$0xff]
        %v694 = vld [vmem:[%s469 + $0x120] sm:$0xff]
        %v695 = vld [vmem:[%s469 + $0x128] sm:$0xff]
        %v696 = vld [vmem:[%s469 + $0x130] sm:$0xff]
        %v697 = vld [vmem:[%s469 + $0x138] sm:$0xff]
        %v698 = vld [vmem:[%s469 + $0x140] sm:$0xff]
        %v699 = vld [vmem:[%s469 + $0x148] sm:$0xff]
        %v700 = vld [vmem:[%s469 + $0x150] sm:$0xff]
        %v701 = vld [vmem:[%s469 + $0x158] sm:$0xff]
        %v702 = vld [vmem:[%s469 + $0x160] sm:$0xff]
        %v703 = vld [vmem:[%s469 + $0x168] sm:$0xff]
        %v704 = vld [vmem:[%s469 + $0x170] sm:$0xff]
        %v705 = vld [vmem:[%s469 + $0x178] sm:$0xff]
        %v706 = vld [vmem:[%s469 + $0x180] sm:$0xff]
        %v707 = vld [vmem:[%s469 + $0x188] sm:$0xff]
        %v708 = vld [vmem:[%s469 + $0x190] sm:$0xff]
        %v709 = vld [vmem:[%s469 + $0x198] sm:$0xff]
        %v710 = vld [vmem:[%s469 + $0x1a0] sm:$0xff]
        %v711 = vld [vmem:[%s469 + $0x1a8] sm:$0xff]
        %v712 = vld [vmem:[%s469 + $0x1b0] sm:$0xff]
        %v713 = vld [vmem:[%s469 + $0x1b8] sm:$0xff]
        %v714 = vld [vmem:[%s469 + $0x1c0] sm:$0xff]
        %v715 = vld [vmem:[%s469 + $0x1c8] sm:$0xff]
        %v716 = vld [vmem:[%s469 + $0x1d0] sm:$0xff]
        %v717 = vld [vmem:[%s469 + $0x1d8] sm:$0xff]
        %v718 = vld [vmem:[%s469 + $0x1e0] sm:$0xff]
        %v719 = vld [vmem:[%s469 + $0x1e8] sm:$0xff]
        %v720 = vld [vmem:[%s469 + $0x1f0] sm:$0xff]
        %v721 = vld [vmem:[%s469 + $0x1f8] sm:$0xff]
        %v722 = vld [vmem:[%s510] sm:$0x3]
        %v724 = vperm.slane %v722, 0
        %v725 = vperm.slane %v722, 1
        %v792 = vunpack.c.l.b16 %v658
        %v793 = vunpack.c.h.b16 %v658
        %v794 = vunpack.c.l.b16 %v659
        %v795 = vunpack.c.h.b16 %v659
        %v796 = vunpack.c.l.b16 %v660
        %v797 = vunpack.c.h.b16 %v660
        %v798 = vunpack.c.l.b16 %v661
        %v799 = vunpack.c.h.b16 %v661
        %v800 = vunpack.c.l.b16 %v662
        %v801 = vunpack.c.h.b16 %v662
        %v802 = vunpack.c.l.b16 %v663
        %v803 = vunpack.c.h.b16 %v663
        %v804 = vunpack.c.l.b16 %v664
        %v805 = vunpack.c.h.b16 %v664
        %v806 = vunpack.c.l.b16 %v665
        %v807 = vunpack.c.h.b16 %v665
        %v808 = vunpack.c.l.b16 %v666
        %v809 = vunpack.c.h.b16 %v666
        %v810 = vunpack.c.l.b16 %v667
        %v811 = vunpack.c.h.b16 %v667
        %v812 = vunpack.c.l.b16 %v668
        %v813 = vunpack.c.h.b16 %v668
        %v814 = vunpack.c.l.b16 %v669
        %v815 = vunpack.c.h.b16 %v669
        %v816 = vunpack.c.l.b16 %v670
        %v817 = vunpack.c.h.b16 %v670
        %v818 = vunpack.c.l.b16 %v671
        %v819 = vunpack.c.h.b16 %v671
        %v820 = vunpack.c.l.b16 %v672
        %v821 = vunpack.c.h.b16 %v672
        %v822 = vunpack.c.l.b16 %v673
        %v823 = vunpack.c.h.b16 %v673
        %v824 = vunpack.c.l.b16 %v674
        %v825 = vunpack.c.h.b16 %v674
        %v826 = vunpack.c.l.b16 %v675
        %v827 = vunpack.c.h.b16 %v675
        %v828 = vunpack.c.l.b16 %v676
        %v829 = vunpack.c.h.b16 %v676
        %v830 = vunpack.c.l.b16 %v677
        %v831 = vunpack.c.h.b16 %v677
        %v832 = vunpack.c.l.b16 %v678
        %v833 = vunpack.c.h.b16 %v678
        %v834 = vunpack.c.l.b16 %v679
        %v835 = vunpack.c.h.b16 %v679
        %v836 = vunpack.c.l.b16 %v680
        %v837 = vunpack.c.h.b16 %v680
        %v838 = vunpack.c.l.b16 %v681
        %v839 = vunpack.c.h.b16 %v681
        %v840 = vunpack.c.l.b16 %v682
        %v841 = vunpack.c.h.b16 %v682
        %v842 = vunpack.c.l.b16 %v683
        %v843 = vunpack.c.h.b16 %v683
        %v844 = vunpack.c.l.b16 %v684
        %v845 = vunpack.c.h.b16 %v684
        %v846 = vunpack.c.l.b16 %v685
        %v847 = vunpack.c.h.b16 %v685
        %v848 = vunpack.c.l.b16 %v686
        %v849 = vunpack.c.h.b16 %v686
        %v850 = vunpack.c.l.b16 %v687
        %v851 = vunpack.c.h.b16 %v687
        %v852 = vunpack.c.l.b16 %v688
        %v853 = vunpack.c.h.b16 %v688
        %v854 = vunpack.c.l.b16 %v689
        %v855 = vunpack.c.h.b16 %v689
        %v856 = vunpack.c.l.b16 %v690
        %v857 = vunpack.c.h.b16 %v690
        %v858 = vunpack.c.l.b16 %v691
        %v859 = vunpack.c.h.b16 %v691
        %v860 = vunpack.c.l.b16 %v692
        %v861 = vunpack.c.h.b16 %v692
        %v862 = vunpack.c.l.b16 %v693
        %v863 = vunpack.c.h.b16 %v693
        %v864 = vunpack.c.l.b16 %v694
        %v865 = vunpack.c.h.b16 %v694
        %v866 = vunpack.c.l.b16 %v695
        %v867 = vunpack.c.h.b16 %v695
        %v868 = vunpack.c.l.b16 %v696
        %v869 = vunpack.c.h.b16 %v696
        %v870 = vunpack.c.l.b16 %v697
        %v871 = vunpack.c.h.b16 %v697
        %v872 = vunpack.c.l.b16 %v698
        %v873 = vunpack.c.h.b16 %v698
        %v874 = vunpack.c.l.b16 %v699
        %v875 = vunpack.c.h.b16 %v699
        %v876 = vunpack.c.l.b16 %v700
        %v877 = vunpack.c.h.b16 %v700
        %v878 = vunpack.c.l.b16 %v701
        %v879 = vunpack.c.h.b16 %v701
        %v880 = vunpack.c.l.b16 %v702
        %v881 = vunpack.c.h.b16 %v702
        %v882 = vunpack.c.l.b16 %v703
        %v883 = vunpack.c.h.b16 %v703
        %v884 = vunpack.c.l.b16 %v704
        %v885 = vunpack.c.h.b16 %v704
        %v886 = vunpack.c.l.b16 %v705
        %v887 = vunpack.c.h.b16 %v705
        %v888 = vunpack.c.l.b16 %v706
        %v889 = vunpack.c.h.b16 %v706
        %v890 = vunpack.c.l.b16 %v707
        %v891 = vunpack.c.h.b16 %v707
        %v892 = vunpack.c.l.b16 %v708
        %v893 = vunpack.c.h.b16 %v708
        %v894 = vunpack.c.l.b16 %v709
        %v895 = vunpack.c.h.b16 %v709
        %v896 = vunpack.c.l.b16 %v710
        %v897 = vunpack.c.h.b16 %v710
        %v898 = vunpack.c.l.b16 %v711
        %v899 = vunpack.c.h.b16 %v711
        %v900 = vunpack.c.l.b16 %v712
        %v901 = vunpack.c.h.b16 %v712
        %v902 = vunpack.c.l.b16 %v713
        %v903 = vunpack.c.h.b16 %v713
        %v904 = vunpack.c.l.b16 %v714
        %v905 = vunpack.c.h.b16 %v714
        %v906 = vunpack.c.l.b16 %v715
        %v907 = vunpack.c.h.b16 %v715
        %v908 = vunpack.c.l.b16 %v716
        %v909 = vunpack.c.h.b16 %v716
        %v910 = vunpack.c.l.b16 %v717
        %v911 = vunpack.c.h.b16 %v717
        %v912 = vunpack.c.l.b16 %v718
        %v913 = vunpack.c.h.b16 %v718
        %v914 = vunpack.c.l.b16 %v719
        %v915 = vunpack.c.h.b16 %v719
        %v916 = vunpack.c.l.b16 %v720
        %v917 = vunpack.c.h.b16 %v720
        %v918 = vunpack.c.l.b16 %v721
        %v919 = vunpack.c.h.b16 %v721
        %v920 = vpack.c.b16 %v794, %v792
        %v921 = vpack.c.b16 %v795, %v793
        %v922 = vpack.c.b16 %v798, %v796
        %v923 = vpack.c.b16 %v799, %v797
        %v924 = vpack.c.b16 %v802, %v800
        %v925 = vpack.c.b16 %v803, %v801
        %v926 = vpack.c.b16 %v806, %v804
        %v927 = vpack.c.b16 %v807, %v805
        %v928 = vpack.c.b16 %v810, %v808
        %v929 = vpack.c.b16 %v811, %v809
        %v930 = vpack.c.b16 %v814, %v812
        %v931 = vpack.c.b16 %v815, %v813
        %v932 = vpack.c.b16 %v818, %v816
        %v933 = vpack.c.b16 %v819, %v817
        %v934 = vpack.c.b16 %v822, %v820
        %v935 = vpack.c.b16 %v823, %v821
        %v936 = vpack.c.b16 %v826, %v824
        %v937 = vpack.c.b16 %v827, %v825
        %v938 = vpack.c.b16 %v830, %v828
        %v939 = vpack.c.b16 %v831, %v829
        %v940 = vpack.c.b16 %v834, %v832
        %v941 = vpack.c.b16 %v835, %v833
        %v942 = vpack.c.b16 %v838, %v836
        %v943 = vpack.c.b16 %v839, %v837
        %v944 = vpack.c.b16 %v842, %v840
        %v945 = vpack.c.b16 %v843, %v841
        %v946 = vpack.c.b16 %v846, %v844
        %v947 = vpack.c.b16 %v847, %v845
        %v948 = vpack.c.b16 %v850, %v848
        %v949 = vpack.c.b16 %v851, %v849
        %v950 = vpack.c.b16 %v854, %v852
        %v951 = vpack.c.b16 %v855, %v853
        %v952 = vpack.c.b16 %v858, %v856
        %v953 = vpack.c.b16 %v859, %v857
        %v954 = vpack.c.b16 %v862, %v860
        %v955 = vpack.c.b16 %v863, %v861
        %v956 = vpack.c.b16 %v866, %v864
        %v957 = vpack.c.b16 %v867, %v865
        %v958 = vpack.c.b16 %v870, %v868
        %v959 = vpack.c.b16 %v871, %v869
        %v960 = vpack.c.b16 %v874, %v872
        %v961 = vpack.c.b16 %v875, %v873
        %v962 = vpack.c.b16 %v878, %v876
        %v963 = vpack.c.b16 %v879, %v877
        %v964 = vpack.c.b16 %v882, %v880
        %v965 = vpack.c.b16 %v883, %v881
        %v966 = vpack.c.b16 %v886, %v884
        %v967 = vpack.c.b16 %v887, %v885
        %v968 = vpack.c.b16 %v890, %v888
        %v969 = vpack.c.b16 %v891, %v889
        %v970 = vpack.c.b16 %v894, %v892
        %v971 = vpack.c.b16 %v895, %v893
        %v972 = vpack.c.b16 %v898, %v896
        %v973 = vpack.c.b16 %v899, %v897
        %v974 = vpack.c.b16 %v902, %v900
        %v975 = vpack.c.b16 %v903, %v901
        %v976 = vpack.c.b16 %v906, %v904
        %v977 = vpack.c.b16 %v907, %v905
        %v978 = vpack.c.b16 %v910, %v908
        %v979 = vpack.c.b16 %v911, %v909
        %v980 = vpack.c.b16 %v914, %v912
        %v981 = vpack.c.b16 %v915, %v913
        %v982 = vpack.c.b16 %v918, %v916
        %v983 = vpack.c.b16 %v919, %v917
        %1048 = vmatpush.bf16.msra.mxu0 %v934
        %1049 = vmatpush.bf16.msra.mxu0 %v932
        %1050 = vmatpush.bf16.msra.mxu0 %v930
        %1051 = vmatpush.bf16.msra.mxu0 %v928
        %1052 = vmatpush.bf16.msra.mxu0 %v926
        %1053 = vmatpush.bf16.msra.mxu0 %v924
        %1054 = vmatpush.bf16.msra.mxu0 %v922
        %1055 = vmatpush.bf16.msra.mxu0 %v920
        %1056 = vmatmul.bf16.gmra.mxu0 %v610
        %v1057 = vpop.f32.mrf.mxu0
        %v1058 = vadd.f32 %v724, %v1057
        %v1059 = vpop.f32.mrf.mxu0
        %v1060 = vadd.f32 %v724, %v1059
        %1061 = vmatmul.bf16.gmra.mxu0 %v614
        %v1062 = vpop.f32.mrf.mxu0
        %v1063 = vadd.f32 %v724, %v1062
        %v1064 = vpop.f32.mrf.mxu0
        %v1065 = vadd.f32 %v724, %v1064
        %1066 = vmatmul.bf16.gmra.mxu0 %v618
        %v1067 = vpop.f32.mrf.mxu0
        %v1068 = vadd.f32 %v724, %v1067
        %v1069 = vpop.f32.mrf.mxu0
        %v1070 = vadd.f32 %v724, %v1069
        %1071 = vmatmul.bf16.gmra.mxu0 %v622
        %v1072 = vpop.f32.mrf.mxu0
        %v1073 = vadd.f32 %v724, %v1072
        %v1074 = vpop.f32.mrf.mxu0
        %v1075 = vadd.f32 %v724, %v1074
        %1076 = vmatmul.bf16.gmra.mxu0 %v626
        %v1077 = vpop.f32.mrf.mxu0
        %v1078 = vadd.f32 %v724, %v1077
        %v1079 = vpop.f32.mrf.mxu0
        %v1080 = vadd.f32 %v724, %v1079
        %1081 = vmatmul.bf16.gmra.mxu0 %v630
        %v1082 = vpop.f32.mrf.mxu0
        %v1083 = vadd.f32 %v724, %v1082
        %v1084 = vpop.f32.mrf.mxu0
        %v1085 = vadd.f32 %v724, %v1084
        %1086 = vmatmul.bf16.gmra.mxu0 %v634
        %v1087 = vpop.f32.mrf.mxu0
        %v1088 = vadd.f32 %v724, %v1087
        %v1089 = vpop.f32.mrf.mxu0
        %v1090 = vadd.f32 %v724, %v1089
        %1091 = vmatmul.bf16.gmra.mxu0 %v638
        %v1092 = vpop.f32.mrf.mxu0
        %v1093 = vadd.f32 %v724, %v1092
        %v1094 = vpop.f32.mrf.mxu0
        %v1095 = vadd.f32 %v724, %v1094
        %1096 = vmatmul.bf16.gmra.mxu0 %v642
        %v1097 = vpop.f32.mrf.mxu0
        %v1098 = vadd.f32 %v724, %v1097
        %v1099 = vpop.f32.mrf.mxu0
        %v1100 = vadd.f32 %v724, %v1099
        %1101 = vmatmul.bf16.gmra.mxu0 %v646
        %v1102 = vpop.f32.mrf.mxu0
        %v1103 = vadd.f32 %v724, %v1102
        %v1104 = vpop.f32.mrf.mxu0
        %v1105 = vadd.f32 %v724, %v1104
        %1106 = vmatmul.bf16.gmra.mxu0 %v650
        %v1107 = vpop.f32.mrf.mxu0
        %v1108 = vadd.f32 %v724, %v1107
        %v1109 = vpop.f32.mrf.mxu0
        %v1110 = vadd.f32 %v724, %v1109
        %1111 = vmatmul.bf16.gmra.mxu0 %v654
        %v1112 = vpop.f32.mrf.mxu0
        %v1113 = vadd.f32 %v724, %v1112
        %v1114 = vpop.f32.mrf.mxu0
        %v1115 = vadd.f32 %v724, %v1114
        %1116 = vdwg.mxu0
        %1117 = vmatpush.bf16.msra.mxu0 %v950
        %1118 = vmatpush.bf16.msra.mxu0 %v948
        %1119 = vmatpush.bf16.msra.mxu0 %v946
        %1120 = vmatpush.bf16.msra.mxu0 %v944
        %1121 = vmatpush.bf16.msra.mxu0 %v942
        %1122 = vmatpush.bf16.msra.mxu0 %v940
        %1123 = vmatpush.bf16.msra.mxu0 %v938
        %1124 = vmatpush.bf16.msra.mxu0 %v936
        %1125 = vmatmul.bf16.gmra.mxu0 %v611
        %v1126 = vpop.f32.mrf.mxu0
        %v1127 = vadd.f32 %v1058, %v1126
        %v1128 = vpop.f32.mrf.mxu0
        %v1129 = vadd.f32 %v1060, %v1128
        %1130 = vmatmul.bf16.gmra.mxu0 %v615
        %v1131 = vpop.f32.mrf.mxu0
        %v1132 = vadd.f32 %v1063, %v1131
        %v1133 = vpop.f32.mrf.mxu0
        %v1134 = vadd.f32 %v1065, %v1133
        %1135 = vmatmul.bf16.gmra.mxu0 %v619
        %v1136 = vpop.f32.mrf.mxu0
        %v1137 = vadd.f32 %v1068, %v1136
        %v1138 = vpop.f32.mrf.mxu0
        %v1139 = vadd.f32 %v1070, %v1138
        %1140 = vmatmul.bf16.gmra.mxu0 %v623
        %v1141 = vpop.f32.mrf.mxu0
        %v1142 = vadd.f32 %v1073, %v1141
        %v1143 = vpop.f32.mrf.mxu0
        %v1144 = vadd.f32 %v1075, %v1143
        %1145 = vmatmul.bf16.gmra.mxu0 %v627
        %v1146 = vpop.f32.mrf.mxu0
        %v1147 = vadd.f32 %v1078, %v1146
        %v1148 = vpop.f32.mrf.mxu0
        %v1149 = vadd.f32 %v1080, %v1148
        %1150 = vmatmul.bf16.gmra.mxu0 %v631
        %v1151 = vpop.f32.mrf.mxu0
        %v1152 = vadd.f32 %v1083, %v1151
        %v1153 = vpop.f32.mrf.mxu0
        %v1154 = vadd.f32 %v1085, %v1153
        %1155 = vmatmul.bf16.gmra.mxu0 %v635
        %v1156 = vpop.f32.mrf.mxu0
        %v1157 = vadd.f32 %v1088, %v1156
        %v1158 = vpop.f32.mrf.mxu0
        %v1159 = vadd.f32 %v1090, %v1158
        %1160 = vmatmul.bf16.gmra.mxu0 %v639
        %v1161 = vpop.f32.mrf.mxu0
        %v1162 = vadd.f32 %v1093, %v1161
        %v1163 = vpop.f32.mrf.mxu0
        %v1164 = vadd.f32 %v1095, %v1163
        %1165 = vmatmul.bf16.gmra.mxu0 %v643
        %v1166 = vpop.f32.mrf.mxu0
        %v1167 = vadd.f32 %v1098, %v1166
        %v1168 = vpop.f32.mrf.mxu0
        %v1169 = vadd.f32 %v1100, %v1168
        %1170 = vmatmul.bf16.gmra.mxu0 %v647
        %v1171 = vpop.f32.mrf.mxu0
        %v1172 = vadd.f32 %v1103, %v1171
        %v1173 = vpop.f32.mrf.mxu0
        %v1174 = vadd.f32 %v1105, %v1173
        %1175 = vmatmul.bf16.gmra.mxu0 %v651
        %v1176 = vpop.f32.mrf.mxu0
        %v1177 = vadd.f32 %v1108, %v1176
        %v1178 = vpop.f32.mrf.mxu0
        %v1179 = vadd.f32 %v1110, %v1178
        %1180 = vmatmul.bf16.gmra.mxu0 %v655
        %v1181 = vpop.f32.mrf.mxu0
        %v1182 = vadd.f32 %v1113, %v1181
        %v1183 = vpop.f32.mrf.mxu0
        %v1184 = vadd.f32 %v1115, %v1183
        %1185 = vdwg.mxu0
        %1186 = vmatpush.bf16.msra.mxu0 %v966
        %1187 = vmatpush.bf16.msra.mxu0 %v964
        %1188 = vmatpush.bf16.msra.mxu0 %v962
        %1189 = vmatpush.bf16.msra.mxu0 %v960
        %1190 = vmatpush.bf16.msra.mxu0 %v958
        %1191 = vmatpush.bf16.msra.mxu0 %v956
        %1192 = vmatpush.bf16.msra.mxu0 %v954
        %1193 = vmatpush.bf16.msra.mxu0 %v952
        %1194 = vmatmul.bf16.gmra.mxu0 %v612
        %v1195 = vpop.f32.mrf.mxu0
        %v1196 = vadd.f32 %v1127, %v1195
        %v1197 = vpop.f32.mrf.mxu0
        %v1198 = vadd.f32 %v1129, %v1197
        %1199 = vmatmul.bf16.gmra.mxu0 %v616
        %v1200 = vpop.f32.mrf.mxu0
        %v1201 = vadd.f32 %v1132, %v1200
        %v1202 = vpop.f32.mrf.mxu0
        %v1203 = vadd.f32 %v1134, %v1202
        %1204 = vmatmul.bf16.gmra.mxu0 %v620
        %v1205 = vpop.f32.mrf.mxu0
        %v1206 = vadd.f32 %v1137, %v1205
        %v1207 = vpop.f32.mrf.mxu0
        %v1208 = vadd.f32 %v1139, %v1207
        %1209 = vmatmul.bf16.gmra.mxu0 %v624
        %v1210 = vpop.f32.mrf.mxu0
        %v1211 = vadd.f32 %v1142, %v1210
        %v1212 = vpop.f32.mrf.mxu0
        %v1213 = vadd.f32 %v1144, %v1212
        %1214 = vmatmul.bf16.gmra.mxu0 %v628
        %v1215 = vpop.f32.mrf.mxu0
        %v1216 = vadd.f32 %v1147, %v1215
        %v1217 = vpop.f32.mrf.mxu0
        %v1218 = vadd.f32 %v1149, %v1217
        %1219 = vmatmul.bf16.gmra.mxu0 %v632
        %v1220 = vpop.f32.mrf.mxu0
        %v1221 = vadd.f32 %v1152, %v1220
        %v1222 = vpop.f32.mrf.mxu0
        %v1223 = vadd.f32 %v1154, %v1222
        %1224 = vmatmul.bf16.gmra.mxu0 %v636
        %v1225 = vpop.f32.mrf.mxu0
        %v1226 = vadd.f32 %v1157, %v1225
        %v1227 = vpop.f32.mrf.mxu0
        %v1228 = vadd.f32 %v1159, %v1227
        %1229 = vmatmul.bf16.gmra.mxu0 %v640
        %v1230 = vpop.f32.mrf.mxu0
        %v1231 = vadd.f32 %v1162, %v1230
        %v1232 = vpop.f32.mrf.mxu0
        %v1233 = vadd.f32 %v1164, %v1232
        %1234 = vmatmul.bf16.gmra.mxu0 %v644
        %v1235 = vpop.f32.mrf.mxu0
        %v1236 = vadd.f32 %v1167, %v1235
        %v1237 = vpop.f32.mrf.mxu0
        %v1238 = vadd.f32 %v1169, %v1237
        %1239 = vmatmul.bf16.gmra.mxu0 %v648
        %v1240 = vpop.f32.mrf.mxu0
        %v1241 = vadd.f32 %v1172, %v1240
        %v1242 = vpop.f32.mrf.mxu0
        %v1243 = vadd.f32 %v1174, %v1242
        %1244 = vmatmul.bf16.gmra.mxu0 %v652
        %v1245 = vpop.f32.mrf.mxu0
        %v1246 = vadd.f32 %v1177, %v1245
        %v1247 = vpop.f32.mrf.mxu0
        %v1248 = vadd.f32 %v1179, %v1247
        %1249 = vmatmul.bf16.gmra.mxu0 %v656
        %v1250 = vpop.f32.mrf.mxu0
        %v1251 = vadd.f32 %v1182, %v1250
        %v1252 = vpop.f32.mrf.mxu0
        %v1253 = vadd.f32 %v1184, %v1252
        %1254 = vdwg.mxu0
        %1255 = vmatpush.bf16.msra.mxu0 %v982
        %1256 = vmatpush.bf16.msra.mxu0 %v980
        %1257 = vmatpush.bf16.msra.mxu0 %v978
        %1258 = vmatpush.bf16.msra.mxu0 %v976
        %1259 = vmatpush.bf16.msra.mxu0 %v974
        %1260 = vmatpush.bf16.msra.mxu0 %v972
        %1261 = vmatpush.bf16.msra.mxu0 %v970
        %1262 = vmatpush.bf16.msra.mxu0 %v968
        %1263 = vmatmul.bf16.gmra.mxu0 %v613
        %v1264 = vpop.f32.mrf.mxu0
        %v1265 = vadd.f32 %v1196, %v1264
        %v1266 = vpop.f32.mrf.mxu0
        %v1267 = vadd.f32 %v1198, %v1266
        %1268 = vmatmul.bf16.gmra.mxu0 %v617
        %v1269 = vpop.f32.mrf.mxu0
        %v1270 = vadd.f32 %v1201, %v1269
        %v1271 = vpop.f32.mrf.mxu0
        %v1272 = vadd.f32 %v1203, %v1271
        %1273 = vmatmul.bf16.gmra.mxu0 %v621
        %v1274 = vpop.f32.mrf.mxu0
        %v1275 = vadd.f32 %v1206, %v1274
        %v1276 = vpop.f32.mrf.mxu0
        %v1277 = vadd.f32 %v1208, %v1276
        %1278 = vmatmul.bf16.gmra.mxu0 %v625
        %v1279 = vpop.f32.mrf.mxu0
        %v1280 = vadd.f32 %v1211, %v1279
        %v1281 = vpop.f32.mrf.mxu0
        %v1282 = vadd.f32 %v1213, %v1281
        %1283 = vmatmul.bf16.gmra.mxu0 %v629
        %v1284 = vpop.f32.mrf.mxu0
        %v1285 = vadd.f32 %v1216, %v1284
        %v1286 = vpop.f32.mrf.mxu0
        %v1287 = vadd.f32 %v1218, %v1286
        %1288 = vmatmul.bf16.gmra.mxu0 %v633
        %v1289 = vpop.f32.mrf.mxu0
        %v1290 = vadd.f32 %v1221, %v1289
        %v1291 = vpop.f32.mrf.mxu0
        %v1292 = vadd.f32 %v1223, %v1291
        %1293 = vmatmul.bf16.gmra.mxu0 %v637
        %v1294 = vpop.f32.mrf.mxu0
        %v1295 = vadd.f32 %v1226, %v1294
        %v1296 = vpop.f32.mrf.mxu0
        %v1297 = vadd.f32 %v1228, %v1296
        %1298 = vmatmul.bf16.gmra.mxu0 %v641
        %v1299 = vpop.f32.mrf.mxu0
        %v1300 = vadd.f32 %v1231, %v1299
        %v1301 = vpop.f32.mrf.mxu0
        %v1302 = vadd.f32 %v1233, %v1301
        %1303 = vmatmul.bf16.gmra.mxu0 %v645
        %v1304 = vpop.f32.mrf.mxu0
        %v1305 = vadd.f32 %v1236, %v1304
        %v1306 = vpop.f32.mrf.mxu0
        %v1307 = vadd.f32 %v1238, %v1306
        %1308 = vmatmul.bf16.gmra.mxu0 %v649
        %v1309 = vpop.f32.mrf.mxu0
        %v1310 = vadd.f32 %v1241, %v1309
        %v1311 = vpop.f32.mrf.mxu0
        %v1312 = vadd.f32 %v1243, %v1311
        %1313 = vmatmul.bf16.gmra.mxu0 %v653
        %v1314 = vpop.f32.mrf.mxu0
        %v1315 = vadd.f32 %v1246, %v1314
        %v1316 = vpop.f32.mrf.mxu0
        %v1317 = vadd.f32 %v1248, %v1316
        %1318 = vmatmul.bf16.gmra.mxu0 %v657
        %v1319 = vpop.f32.mrf.mxu0
        %v1320 = vadd.f32 %v1251, %v1319
        %v1321 = vpop.f32.mrf.mxu0
        %v1322 = vadd.f32 %v1253, %v1321
        %1323 = vdwg.mxu0
        %1324 = vmatpush.bf16.msra.mxu0 %v935
        %1325 = vmatpush.bf16.msra.mxu0 %v933
        %1326 = vmatpush.bf16.msra.mxu0 %v931
        %1327 = vmatpush.bf16.msra.mxu0 %v929
        %1328 = vmatpush.bf16.msra.mxu0 %v927
        %1329 = vmatpush.bf16.msra.mxu0 %v925
        %1330 = vmatpush.bf16.msra.mxu0 %v923
        %1331 = vmatpush.bf16.msra.mxu0 %v921
        %1332 = vmatmul.bf16.gmra.mxu0 %v610
        %v1333 = vpop.f32.mrf.mxu0
        %v1334 = vadd.f32 %v725, %v1333
        %v1335 = vpop.f32.mrf.mxu0
        %v1336 = vadd.f32 %v725, %v1335
        %1337 = vmatmul.bf16.gmra.mxu0 %v614
        %v1338 = vpop.f32.mrf.mxu0
        %v1339 = vadd.f32 %v725, %v1338
        %v1340 = vpop.f32.mrf.mxu0
        %v1341 = vadd.f32 %v725, %v1340
        %1342 = vmatmul.bf16.gmra.mxu0 %v618
        %v1343 = vpop.f32.mrf.mxu0
        %v1344 = vadd.f32 %v725, %v1343
        %v1345 = vpop.f32.mrf.mxu0
        %v1346 = vadd.f32 %v725, %v1345
        %1347 = vmatmul.bf16.gmra.mxu0 %v622
        %v1348 = vpop.f32.mrf.mxu0
        %v1349 = vadd.f32 %v725, %v1348
        %v1350 = vpop.f32.mrf.mxu0
        %v1351 = vadd.f32 %v725, %v1350
        %1352 = vmatmul.bf16.gmra.mxu0 %v626
        %v1353 = vpop.f32.mrf.mxu0
        %v1354 = vadd.f32 %v725, %v1353
        %v1355 = vpop.f32.mrf.mxu0
        %v1356 = vadd.f32 %v725, %v1355
        %1357 = vmatmul.bf16.gmra.mxu0 %v630
        %v1358 = vpop.f32.mrf.mxu0
        %v1359 = vadd.f32 %v725, %v1358
        %v1360 = vpop.f32.mrf.mxu0
        %v1361 = vadd.f32 %v725, %v1360
        %1362 = vmatmul.bf16.gmra.mxu0 %v634
        %v1363 = vpop.f32.mrf.mxu0
        %v1364 = vadd.f32 %v725, %v1363
        %v1365 = vpop.f32.mrf.mxu0
        %v1366 = vadd.f32 %v725, %v1365
        %1367 = vmatmul.bf16.gmra.mxu0 %v638
        %v1368 = vpop.f32.mrf.mxu0
        %v1369 = vadd.f32 %v725, %v1368
        %v1370 = vpop.f32.mrf.mxu0
        %v1371 = vadd.f32 %v725, %v1370
        %1372 = vmatmul.bf16.gmra.mxu0 %v642
        %v1373 = vpop.f32.mrf.mxu0
        %v1374 = vadd.f32 %v725, %v1373
        %v1375 = vpop.f32.mrf.mxu0
        %v1376 = vadd.f32 %v725, %v1375
        %1377 = vmatmul.bf16.gmra.mxu0 %v646
        %v1378 = vpop.f32.mrf.mxu0
        %v1379 = vadd.f32 %v725, %v1378
        %v1380 = vpop.f32.mrf.mxu0
        %v1381 = vadd.f32 %v725, %v1380
        %1382 = vmatmul.bf16.gmra.mxu0 %v650
        %v1383 = vpop.f32.mrf.mxu0
        %v1384 = vadd.f32 %v725, %v1383
        %v1385 = vpop.f32.mrf.mxu0
        %v1386 = vadd.f32 %v725, %v1385
        %1387 = vmatmul.bf16.gmra.mxu0 %v654
        %v1388 = vpop.f32.mrf.mxu0
        %v1389 = vadd.f32 %v725, %v1388
        %v1390 = vpop.f32.mrf.mxu0
        %v1391 = vadd.f32 %v725, %v1390
        %1392 = vdwg.mxu0
        %1393 = vmatpush.bf16.msra.mxu0 %v951
        %1394 = vmatpush.bf16.msra.mxu0 %v949
        %1395 = vmatpush.bf16.msra.mxu0 %v947
        %1396 = vmatpush.bf16.msra.mxu0 %v945
        %1397 = vmatpush.bf16.msra.mxu0 %v943
        %1398 = vmatpush.bf16.msra.mxu0 %v941
        %1399 = vmatpush.bf16.msra.mxu0 %v939
        %1400 = vmatpush.bf16.msra.mxu0 %v937
        %1401 = vmatmul.bf16.gmra.mxu0 %v611
        %v1402 = vpop.f32.mrf.mxu0
        %v1403 = vadd.f32 %v1334, %v1402
        %v1404 = vpop.f32.mrf.mxu0
        %v1405 = vadd.f32 %v1336, %v1404
        %1406 = vmatmul.bf16.gmra.mxu0 %v615
        %v1407 = vpop.f32.mrf.mxu0
        %v1408 = vadd.f32 %v1339, %v1407
        %v1409 = vpop.f32.mrf.mxu0
        %v1410 = vadd.f32 %v1341, %v1409
        %1411 = vmatmul.bf16.gmra.mxu0 %v619
        %v1412 = vpop.f32.mrf.mxu0
        %v1413 = vadd.f32 %v1344, %v1412
        %v1414 = vpop.f32.mrf.mxu0
        %v1415 = vadd.f32 %v1346, %v1414
        %1416 = vmatmul.bf16.gmra.mxu0 %v623
        %v1417 = vpop.f32.mrf.mxu0
        %v1418 = vadd.f32 %v1349, %v1417
        %v1419 = vpop.f32.mrf.mxu0
        %v1420 = vadd.f32 %v1351, %v1419
        %1421 = vmatmul.bf16.gmra.mxu0 %v627
        %v1422 = vpop.f32.mrf.mxu0
        %v1423 = vadd.f32 %v1354, %v1422
        %v1424 = vpop.f32.mrf.mxu0
        %v1425 = vadd.f32 %v1356, %v1424
        %1426 = vmatmul.bf16.gmra.mxu0 %v631
        %v1427 = vpop.f32.mrf.mxu0
        %v1428 = vadd.f32 %v1359, %v1427
        %v1429 = vpop.f32.mrf.mxu0
        %v1430 = vadd.f32 %v1361, %v1429
        %1431 = vmatmul.bf16.gmra.mxu0 %v635
        %v1432 = vpop.f32.mrf.mxu0
        %v1433 = vadd.f32 %v1364, %v1432
        %v1434 = vpop.f32.mrf.mxu0
        %v1435 = vadd.f32 %v1366, %v1434
        %1436 = vmatmul.bf16.gmra.mxu0 %v639
        %v1437 = vpop.f32.mrf.mxu0
        %v1438 = vadd.f32 %v1369, %v1437
        %v1439 = vpop.f32.mrf.mxu0
        %v1440 = vadd.f32 %v1371, %v1439
        %1441 = vmatmul.bf16.gmra.mxu0 %v643
        %v1442 = vpop.f32.mrf.mxu0
        %v1443 = vadd.f32 %v1374, %v1442
        %v1444 = vpop.f32.mrf.mxu0
        %v1445 = vadd.f32 %v1376, %v1444
        %1446 = vmatmul.bf16.gmra.mxu0 %v647
        %v1447 = vpop.f32.mrf.mxu0
        %v1448 = vadd.f32 %v1379, %v1447
        %v1449 = vpop.f32.mrf.mxu0
        %v1450 = vadd.f32 %v1381, %v1449
        %1451 = vmatmul.bf16.gmra.mxu0 %v651
        %v1452 = vpop.f32.mrf.mxu0
        %v1453 = vadd.f32 %v1384, %v1452
        %v1454 = vpop.f32.mrf.mxu0
        %v1455 = vadd.f32 %v1386, %v1454
        %1456 = vmatmul.bf16.gmra.mxu0 %v655
        %v1457 = vpop.f32.mrf.mxu0
        %v1458 = vadd.f32 %v1389, %v1457
        %v1459 = vpop.f32.mrf.mxu0
        %v1460 = vadd.f32 %v1391, %v1459
        %1461 = vdwg.mxu0
        %1462 = vmatpush.bf16.msra.mxu0 %v967
        %1463 = vmatpush.bf16.msra.mxu0 %v965
        %1464 = vmatpush.bf16.msra.mxu0 %v963
        %1465 = vmatpush.bf16.msra.mxu0 %v961
        %1466 = vmatpush.bf16.msra.mxu0 %v959
        %1467 = vmatpush.bf16.msra.mxu0 %v957
        %1468 = vmatpush.bf16.msra.mxu0 %v955
        %1469 = vmatpush.bf16.msra.mxu0 %v953
        %1470 = vmatmul.bf16.gmra.mxu0 %v612
        %v1471 = vpop.f32.mrf.mxu0
        %v1472 = vadd.f32 %v1403, %v1471
        %v1473 = vpop.f32.mrf.mxu0
        %v1474 = vadd.f32 %v1405, %v1473
        %1475 = vmatmul.bf16.gmra.mxu0 %v616
        %v1476 = vpop.f32.mrf.mxu0
        %v1477 = vadd.f32 %v1408, %v1476
        %v1478 = vpop.f32.mrf.mxu0
        %v1479 = vadd.f32 %v1410, %v1478
        %1480 = vmatmul.bf16.gmra.mxu0 %v620
        %v1481 = vpop.f32.mrf.mxu0
        %v1482 = vadd.f32 %v1413, %v1481
        %v1483 = vpop.f32.mrf.mxu0
        %v1484 = vadd.f32 %v1415, %v1483
        %1485 = vmatmul.bf16.gmra.mxu0 %v624
        %v1486 = vpop.f32.mrf.mxu0
        %v1487 = vadd.f32 %v1418, %v1486
        %v1488 = vpop.f32.mrf.mxu0
        %v1489 = vadd.f32 %v1420, %v1488
        %1490 = vmatmul.bf16.gmra.mxu0 %v628
        %v1491 = vpop.f32.mrf.mxu0
        %v1492 = vadd.f32 %v1423, %v1491
        %v1493 = vpop.f32.mrf.mxu0
        %v1494 = vadd.f32 %v1425, %v1493
        %1495 = vmatmul.bf16.gmra.mxu0 %v632
        %v1496 = vpop.f32.mrf.mxu0
        %v1497 = vadd.f32 %v1428, %v1496
        %v1498 = vpop.f32.mrf.mxu0
        %v1499 = vadd.f32 %v1430, %v1498
        %1500 = vmatmul.bf16.gmra.mxu0 %v636
        %v1501 = vpop.f32.mrf.mxu0
        %v1502 = vadd.f32 %v1433, %v1501
        %v1503 = vpop.f32.mrf.mxu0
        %v1504 = vadd.f32 %v1435, %v1503
        %1505 = vmatmul.bf16.gmra.mxu0 %v640
        %v1506 = vpop.f32.mrf.mxu0
        %v1507 = vadd.f32 %v1438, %v1506
        %v1508 = vpop.f32.mrf.mxu0
        %v1509 = vadd.f32 %v1440, %v1508
        %1510 = vmatmul.bf16.gmra.mxu0 %v644
        %v1511 = vpop.f32.mrf.mxu0
        %v1512 = vadd.f32 %v1443, %v1511
        %v1513 = vpop.f32.mrf.mxu0
        %v1514 = vadd.f32 %v1445, %v1513
        %1515 = vmatmul.bf16.gmra.mxu0 %v648
        %v1516 = vpop.f32.mrf.mxu0
        %v1517 = vadd.f32 %v1448, %v1516
        %v1518 = vpop.f32.mrf.mxu0
        %v1519 = vadd.f32 %v1450, %v1518
        %1520 = vmatmul.bf16.gmra.mxu0 %v652
        %v1521 = vpop.f32.mrf.mxu0
        %v1522 = vadd.f32 %v1453, %v1521
        %v1523 = vpop.f32.mrf.mxu0
        %v1524 = vadd.f32 %v1455, %v1523
        %1525 = vmatmul.bf16.gmra.mxu0 %v656
        %v1526 = vpop.f32.mrf.mxu0
        %v1527 = vadd.f32 %v1458, %v1526
        %v1528 = vpop.f32.mrf.mxu0
        %v1529 = vadd.f32 %v1460, %v1528
        %1530 = vdwg.mxu0
        %1531 = vmatpush.bf16.msra.mxu0 %v983
        %1532 = vmatpush.bf16.msra.mxu0 %v981
        %1533 = vmatpush.bf16.msra.mxu0 %v979
        %1534 = vmatpush.bf16.msra.mxu0 %v977
        %1535 = vmatpush.bf16.msra.mxu0 %v975
        %1536 = vmatpush.bf16.msra.mxu0 %v973
        %1537 = vmatpush.bf16.msra.mxu0 %v971
        %1538 = vmatpush.bf16.msra.mxu0 %v969
        %1539 = vmatmul.bf16.gmra.mxu0 %v613
        %v1540 = vpop.f32.mrf.mxu0
        %v1541 = vadd.f32 %v1472, %v1540
        %v1542 = vpop.f32.mrf.mxu0
        %v1543 = vadd.f32 %v1474, %v1542
        %1544 = vmatmul.bf16.gmra.mxu0 %v617
        %v1545 = vpop.f32.mrf.mxu0
        %v1546 = vadd.f32 %v1477, %v1545
        %v1547 = vpop.f32.mrf.mxu0
        %v1548 = vadd.f32 %v1479, %v1547
        %1549 = vmatmul.bf16.gmra.mxu0 %v621
        %v1550 = vpop.f32.mrf.mxu0
        %v1551 = vadd.f32 %v1482, %v1550
        %v1552 = vpop.f32.mrf.mxu0
        %v1553 = vadd.f32 %v1484, %v1552
        %1554 = vmatmul.bf16.gmra.mxu0 %v625
        %v1555 = vpop.f32.mrf.mxu0
        %v1556 = vadd.f32 %v1487, %v1555
        %v1557 = vpop.f32.mrf.mxu0
        %v1558 = vadd.f32 %v1489, %v1557
        %1559 = vmatmul.bf16.gmra.mxu0 %v629
        %v1560 = vpop.f32.mrf.mxu0
        %v1561 = vadd.f32 %v1492, %v1560
        %v1562 = vpop.f32.mrf.mxu0
        %v1563 = vadd.f32 %v1494, %v1562
        %1564 = vmatmul.bf16.gmra.mxu0 %v633
        %v1565 = vpop.f32.mrf.mxu0
        %v1566 = vadd.f32 %v1497, %v1565
        %v1567 = vpop.f32.mrf.mxu0
        %v1568 = vadd.f32 %v1499, %v1567
        %1569 = vmatmul.bf16.gmra.mxu0 %v637
        %v1570 = vpop.f32.mrf.mxu0
        %v1571 = vadd.f32 %v1502, %v1570
        %v1572 = vpop.f32.mrf.mxu0
        %v1573 = vadd.f32 %v1504, %v1572
        %1574 = vmatmul.bf16.gmra.mxu0 %v641
        %v1575 = vpop.f32.mrf.mxu0
        %v1576 = vadd.f32 %v1507, %v1575
        %v1577 = vpop.f32.mrf.mxu0
        %v1578 = vadd.f32 %v1509, %v1577
        %1579 = vmatmul.bf16.gmra.mxu0 %v645
        %v1580 = vpop.f32.mrf.mxu0
        %v1581 = vadd.f32 %v1512, %v1580
        %v1582 = vpop.f32.mrf.mxu0
        %v1583 = vadd.f32 %v1514, %v1582
        %1584 = vmatmul.bf16.gmra.mxu0 %v649
        %v1585 = vpop.f32.mrf.mxu0
        %v1586 = vadd.f32 %v1517, %v1585
        %v1587 = vpop.f32.mrf.mxu0
        %v1588 = vadd.f32 %v1519, %v1587
        %1589 = vmatmul.bf16.gmra.mxu0 %v653
        %v1590 = vpop.f32.mrf.mxu0
        %v1591 = vadd.f32 %v1522, %v1590
        %v1592 = vpop.f32.mrf.mxu0
        %v1593 = vadd.f32 %v1524, %v1592
        %1594 = vmatmul.bf16.gmra.mxu0 %v657
        %v1595 = vpop.f32.mrf.mxu0
        %v1596 = vadd.f32 %v1527, %v1595
        %v1597 = vpop.f32.mrf.mxu0
        %v1598 = vadd.f32 %v1529, %v1597
        %1599 = vdwg.mxu0
        %1600 = vst [vmem:[%s498] sm:$0xff] %v1265
        %1601 = vst [vmem:[%s498 + $0x8] sm:$0xff] %v1541
        %1602 = vst [vmem:[%s498 + $0x10] sm:$0xff] %v1267
        %1603 = vst [vmem:[%s498 + $0x18] sm:$0xff] %v1543
        %1604 = vst [vmem:[%s498 + $0x20] sm:$0xff] %v1270
        %1605 = vst [vmem:[%s498 + $0x28] sm:$0xff] %v1546
        %1606 = vst [vmem:[%s498 + $0x30] sm:$0xff] %v1272
        %1607 = vst [vmem:[%s498 + $0x38] sm:$0xff] %v1548
        %1608 = vst [vmem:[%s498 + $0x40] sm:$0xff] %v1275
        %1609 = vst [vmem:[%s498 + $0x48] sm:$0xff] %v1551
        %1610 = vst [vmem:[%s498 + $0x50] sm:$0xff] %v1277
        %1611 = vst [vmem:[%s498 + $0x58] sm:$0xff] %v1553
        %1612 = vst [vmem:[%s498 + $0x60] sm:$0xff] %v1280
        %1613 = vst [vmem:[%s498 + $0x68] sm:$0xff] %v1556
        %1614 = vst [vmem:[%s498 + $0x70] sm:$0xff] %v1282
        %1615 = vst [vmem:[%s498 + $0x78] sm:$0xff] %v1558
        %1616 = vst [vmem:[%s498 + $0x80] sm:$0xff] %v1285
        %1617 = vst [vmem:[%s498 + $0x88] sm:$0xff] %v1561
        %1618 = vst [vmem:[%s498 + $0x90] sm:$0xff] %v1287
        %1619 = vst [vmem:[%s498 + $0x98] sm:$0xff] %v1563
        %1620 = vst [vmem:[%s498 + $0xa0] sm:$0xff] %v1290
        %1621 = vst [vmem:[%s498 + $0xa8] sm:$0xff] %v1566
        %1622 = vst [vmem:[%s498 + $0xb0] sm:$0xff] %v1292
        %1623 = vst [vmem:[%s498 + $0xb8] sm:$0xff] %v1568
        %1624 = vst [vmem:[%s498 + $0xc0] sm:$0xff] %v1295
        %1625 = vst [vmem:[%s498 + $0xc8] sm:$0xff] %v1571
        %1626 = vst [vmem:[%s498 + $0xd0] sm:$0xff] %v1297
        %1627 = vst [vmem:[%s498 + $0xd8] sm:$0xff] %v1573
        %1628 = vst [vmem:[%s498 + $0xe0] sm:$0xff] %v1300
        %1629 = vst [vmem:[%s498 + $0xe8] sm:$0xff] %v1576
        %1630 = vst [vmem:[%s498 + $0xf0] sm:$0xff] %v1302
        %1631 = vst [vmem:[%s498 + $0xf8] sm:$0xff] %v1578
        %1632 = vst [vmem:[%s498 + $0x100] sm:$0xff] %v1305
        %1633 = vst [vmem:[%s498 + $0x108] sm:$0xff] %v1581
        %1634 = vst [vmem:[%s498 + $0x110] sm:$0xff] %v1307
        %1635 = vst [vmem:[%s498 + $0x118] sm:$0xff] %v1583
        %1636 = vst [vmem:[%s498 + $0x120] sm:$0xff] %v1310
        %1637 = vst [vmem:[%s498 + $0x128] sm:$0xff] %v1586
        %1638 = vst [vmem:[%s498 + $0x130] sm:$0xff] %v1312
        %1639 = vst [vmem:[%s498 + $0x138] sm:$0xff] %v1588
        %1640 = vst [vmem:[%s498 + $0x140] sm:$0xff] %v1315
        %1641 = vst [vmem:[%s498 + $0x148] sm:$0xff] %v1591
        %1642 = vst [vmem:[%s498 + $0x150] sm:$0xff] %v1317
        %1643 = vst [vmem:[%s498 + $0x158] sm:$0xff] %v1593
        %1644 = vst [vmem:[%s498 + $0x160] sm:$0xff] %v1320
        %1645 = vst [vmem:[%s498 + $0x168] sm:$0xff] %v1596
        %1646 = vst [vmem:[%s498 + $0x170] sm:$0xff] %v1322
        %1647 = vst [vmem:[%s498 + $0x178] sm:$0xff] %v1598
        %s1648 = sand.u32 %s114, 1
        %s1649 = sand.u32 %s114, 1
        %s1650 = smul.addr %s1649, 384
        %s1651 = scalar_lea.vmem [#allocation3], %s1650
        // Predicated region
        $region71: #{forward.1} parent=65 // pred_check
          %p1652 = pneg %p124
        $region72: #{forward.1} parent=65 // pred_check_branch
          %1654 = sbr.rel (%p1652) target = $region74
        $region73: #{forward.1} parent=65 // pred_region
          %s1655 = smul.u32 24, %s18
          %s1656 = smul.u32 2, %s19
          %s1657 = smul.addr %s1655, 4
          %s1658 = sadd.s32 %s1656, %s1657
          %s1659 = smul.addr %s1658, 8
          %s1660 = scalar_lea.vmem %s3, %s1659
          // Predicated region
          $region75: #{forward.1} parent=73 // pred_check
            _
          $region76: #{forward.1} parent=73 // pred_check_branch
            %1662 = sbr.rel (0) target = $region78
          $region77: #{forward.1} parent=73 // pred_region
            // Predicated region
            $region79: #{forward.1} parent=77 // pred_check
              _
            $region80: #{forward.1} parent=77 // pred_check_branch
              %1664 = sbr.rel (0) target = $region82
            $region81: #{forward.1} parent=77 // pred_region
              loop: start=0, step=1, limit=1
              $region83: #{forward.1} parent=81 // loop_pre_header
                _
              $region84: #{forward.1} parent=81 // loop_header
                %s1666 = sphi 0, %s1670
                %p1667 = scmp.ge.s32.totalorder %s1666, 1
                %s1671 = sphi %s1651, %s1651
                %s1672 = sphi %s1660, %s1660
              $region85: #{forward.1} parent=81 // loop_header_branch
                %1669 = sbr.rel (%p1667) target = $region89
              $region86: #{forward.1} parent=81 // loop_body
                %v1673 = vld [vmem:[%s1671] sm:$0xff]
                %1674 = vst [vmem:[%s1672] sm:$0xff] %v1673
                %v1675 = vld [vmem:[%s1671 + $0x8] sm:$0xff]
                %1676 = vst [vmem:[%s1672 + $0x8] sm:$0xff] %v1675
                %v1677 = vld [vmem:[%s1671 + $0x10] sm:$0xff]
                %1678 = vst [vmem:[%s1672 + $0x20] sm:$0xff] %v1677
                %v1679 = vld [vmem:[%s1671 + $0x18] sm:$0xff]
                %1680 = vst [vmem:[%s1672 + $0x28] sm:$0xff] %v1679
                %v1681 = vld [vmem:[%s1671 + $0x20] sm:$0xff]
                %1682 = vst [vmem:[%s1672 + $0x40] sm:$0xff] %v1681
                %v1683 = vld [vmem:[%s1671 + $0x28] sm:$0xff]
                %1684 = vst [vmem:[%s1672 + $0x48] sm:$0xff] %v1683
                %v1685 = vld [vmem:[%s1671 + $0x30] sm:$0xff]
                %1686 = vst [vmem:[%s1672 + $0x60] sm:$0xff] %v1685
                %v1687 = vld [vmem:[%s1671 + $0x38] sm:$0xff]
                %1688 = vst [vmem:[%s1672 + $0x68] sm:$0xff] %v1687
                %v1689 = vld [vmem:[%s1671 + $0x40] sm:$0xff]
                %1690 = vst [vmem:[%s1672 + $0x80] sm:$0xff] %v1689
                %v1691 = vld [vmem:[%s1671 + $0x48] sm:$0xff]
                %1692 = vst [vmem:[%s1672 + $0x88] sm:$0xff] %v1691
                %v1693 = vld [vmem:[%s1671 + $0x50] sm:$0xff]
                %1694 = vst [vmem:[%s1672 + $0xa0] sm:$0xff] %v1693
                %v1695 = vld [vmem:[%s1671 + $0x58] sm:$0xff]
                %1696 = vst [vmem:[%s1672 + $0xa8] sm:$0xff] %v1695
                %v1697 = vld [vmem:[%s1671 + $0x60] sm:$0xff]
                %1698 = vst [vmem:[%s1672 + $0xc0] sm:$0xff] %v1697
                %v1699 = vld [vmem:[%s1671 + $0x68] sm:$0xff]
                %1700 = vst [vmem:[%s1672 + $0xc8] sm:$0xff] %v1699
                %v1701 = vld [vmem:[%s1671 + $0x70] sm:$0xff]
                %1702 = vst [vmem:[%s1672 + $0xe0] sm:$0xff] %v1701
                %v1703 = vld [vmem:[%s1671 + $0x78] sm:$0xff]
                %1704 = vst [vmem:[%s1672 + $0xe8] sm:$0xff] %v1703
                %v1705 = vld [vmem:[%s1671 + $0x80] sm:$0xff]
                %1706 = vst [vmem:[%s1672 + $0x100] sm:$0xff] %v1705
                %v1707 = vld [vmem:[%s1671 + $0x88] sm:$0xff]
                %1708 = vst [vmem:[%s1672 + $0x108] sm:$0xff] %v1707
                %v1709 = vld [vmem:[%s1671 + $0x90] sm:$0xff]
                %1710 = vst [vmem:[%s1672 + $0x120] sm:$0xff] %v1709
                %v1711 = vld [vmem:[%s1671 + $0x98] sm:$0xff]
                %1712 = vst [vmem:[%s1672 + $0x128] sm:$0xff] %v1711
                %v1713 = vld [vmem:[%s1671 + $0xa0] sm:$0xff]
                %1714 = vst [vmem:[%s1672 + $0x140] sm:$0xff] %v1713
                %v1715 = vld [vmem:[%s1671 + $0xa8] sm:$0xff]
                %1716 = vst [vmem:[%s1672 + $0x148] sm:$0xff] %v1715
                %v1717 = vld [vmem:[%s1671 + $0xb0] sm:$0xff]
                %1718 = vst [vmem:[%s1672 + $0x160] sm:$0xff] %v1717
                %v1719 = vld [vmem:[%s1671 + $0xb8] sm:$0xff]
                %1720 = vst [vmem:[%s1672 + $0x168] sm:$0xff] %v1719
                %v1721 = vld [vmem:[%s1671 + $0xc0] sm:$0xff]
                %1722 = vst [vmem:[%s1672 + $0x180] sm:$0xff] %v1721
                %v1723 = vld [vmem:[%s1671 + $0xc8] sm:$0xff]
                %1724 = vst [vmem:[%s1672 + $0x188] sm:$0xff] %v1723
                %v1725 = vld [vmem:[%s1671 + $0xd0] sm:$0xff]
                %1726 = vst [vmem:[%s1672 + $0x1a0] sm:$0xff] %v1725
                %v1727 = vld [vmem:[%s1671 + $0xd8] sm:$0xff]
                %1728 = vst [vmem:[%s1672 + $0x1a8] sm:$0xff] %v1727
                %v1729 = vld [vmem:[%s1671 + $0xe0] sm:$0xff]
                %1730 = vst [vmem:[%s1672 + $0x1c0] sm:$0xff] %v1729
                %v1731 = vld [vmem:[%s1671 + $0xe8] sm:$0xff]
                %1732 = vst [vmem:[%s1672 + $0x1c8] sm:$0xff] %v1731
                %v1733 = vld [vmem:[%s1671 + $0xf0] sm:$0xff]
                %1734 = vst [vmem:[%s1672 + $0x1e0] sm:$0xff] %v1733
                %v1735 = vld [vmem:[%s1671 + $0xf8] sm:$0xff]
                %1736 = vst [vmem:[%s1672 + $0x1e8] sm:$0xff] %v1735
                %v1737 = vld [vmem:[%s1671 + $0x100] sm:$0xff]
                %1738 = vst [vmem:[%s1672 + $0x200] sm:$0xff] %v1737
                %v1739 = vld [vmem:[%s1671 + $0x108] sm:$0xff]
                %1740 = vst [vmem:[%s1672 + $0x208] sm:$0xff] %v1739
                %v1741 = vld [vmem:[%s1671 + $0x110] sm:$0xff]
                %1742 = vst [vmem:[%s1672 + $0x220] sm:$0xff] %v1741
                %v1743 = vld [vmem:[%s1671 + $0x118] sm:$0xff]
                %1744 = vst [vmem:[%s1672 + $0x228] sm:$0xff] %v1743
                %v1745 = vld [vmem:[%s1671 + $0x120] sm:$0xff]
                %1746 = vst [vmem:[%s1672 + $0x240] sm:$0xff] %v1745
                %v1747 = vld [vmem:[%s1671 + $0x128] sm:$0xff]
                %1748 = vst [vmem:[%s1672 + $0x248] sm:$0xff] %v1747
                %v1749 = vld [vmem:[%s1671 + $0x130] sm:$0xff]
                %1750 = vst [vmem:[%s1672 + $0x260] sm:$0xff] %v1749
                %v1751 = vld [vmem:[%s1671 + $0x138] sm:$0xff]
                %1752 = vst [vmem:[%s1672 + $0x268] sm:$0xff] %v1751
                %v1753 = vld [vmem:[%s1671 + $0x140] sm:$0xff]
                %1754 = vst [vmem:[%s1672 + $0x280] sm:$0xff] %v1753
                %v1755 = vld [vmem:[%s1671 + $0x148] sm:$0xff]
                %1756 = vst [vmem:[%s1672 + $0x288] sm:$0xff] %v1755
                %v1757 = vld [vmem:[%s1671 + $0x150] sm:$0xff]
                %1758 = vst [vmem:[%s1672 + $0x2a0] sm:$0xff] %v1757
                %v1759 = vld [vmem:[%s1671 + $0x158] sm:$0xff]
                %1760 = vst [vmem:[%s1672 + $0x2a8] sm:$0xff] %v1759
                %v1761 = vld [vmem:[%s1671 + $0x160] sm:$0xff]
                %1762 = vst [vmem:[%s1672 + $0x2c0] sm:$0xff] %v1761
                %v1763 = vld [vmem:[%s1671 + $0x168] sm:$0xff]
                %1764 = vst [vmem:[%s1672 + $0x2c8] sm:$0xff] %v1763
                %v1765 = vld [vmem:[%s1671 + $0x170] sm:$0xff]
                %1766 = vst [vmem:[%s1672 + $0x2e0] sm:$0xff] %v1765
                %v1767 = vld [vmem:[%s1671 + $0x178] sm:$0xff]
                %1768 = vst [vmem:[%s1672 + $0x2e8] sm:$0xff] %v1767
              $region87: #{forward.1} parent=81 // loop_footer
                %s1670 = sadd.s32 1, %s1666
              $region88: #{forward.1} parent=81 // loop_footer_branch
                %1665 = sbr.rel target = $region84
              $region89: #{forward.1} parent=81 // loop_exit
                _
            $region82: #{forward.1} parent=77 // pred_fallthru
              _
            // Predicated region
            $region90: #{forward.1} parent=77 // pred_check
              _
            $region91: #{forward.1} parent=77 // pred_check_branch
              %1770 = sbr.rel target = $region93
            $region92: #{forward.1} parent=77 // pred_region
              _
            $region93: #{forward.1} parent=77 // pred_fallthru
              _
          $region78: #{forward.1} parent=73 // pred_fallthru
            _
          %1771 = vnop
        $region74: #{forward.1} parent=65 // pred_fallthru
          _
      $region66: #{forward.1} parent=5 // pred_fallthru
        _
      %p1772 = scmp.le.s32.totalorder 2, %s9
      // Predicated region
      $region94: #{forward.1} parent=5 // pred_check
        %p1773 = pneg %p1772
      $region95: #{forward.1} parent=5 // pred_check_branch
        %1775 = sbr.rel (%p1773) target = $region97
      $region96: #{forward.1} parent=5 // pred_region
        %s1776 = ssub.s32 %s9, 2
        // Predicated region
        $region98: #{forward.1} parent=96 // pred_check
          %p1777 = pneg %p130
        $region99: #{forward.1} parent=96 // pred_check_branch
          %1779 = sbr.rel (%p1777) target = $region101
        $region100: #{forward.1} parent=96 // pred_region
          %s1780 = sand.u32 %s115, 1
          %s1781 = sand.u32 %s115, 1
          %s1782 = smul.addr %s1781, 384
          %s1783 = scalar_lea.vmem [#allocation3], %s1782
        $region101: #{forward.1} parent=96 // pred_fallthru
          _
      $region97: #{forward.1} parent=5 // pred_fallthru
        _
    $region6: #{forward.1} parent=1 // loop_footer
      %s13 = sadd.s32 1, %s9
    $region7: #{forward.1} parent=1 // loop_footer_branch
      %8 = sbr.rel target = $region3
    $region8: #{forward.1} parent=1 // loop_exit
      _

</llo_original>
